<compile_context>
chip_gen: v6e
topology: v6e:2x2x1
jax: 0.10.0
libtpu: 0.0.40
codegen_flags: <defaults>
</compile_context>

<pallas_src>
import jax
import jax.numpy as jnp
from jax.experimental import pallas as pl
from jax.experimental.pallas import tpu as pltpu

_GRID = 7  # fc1's flat size == hidden_dim forces a 7x7 input spatial grid


def _round_up(n, m):
    return -(-n // m) * m


# ------------------------------ fused kernel --------------------------------

def _primal_base7_kernel(x_ref, w1_ref, b1_ref, w2_ref, b2_ref, w3_ref, b3_ref,
                         w8_ref, b8_ref, w7_ref, b7_ref, wf_ref, bf_ref, o_ref):
    # x_ref:        (R, 4*Cin)       bf16  pre-im2col'd input slab, R = rup(B*49, 8)
    # w1_ref:       (4*Cin, 128)     bf16
    # w2/w3/w8_ref: (4*128, 128)     bf16  (row-major kh,kw,cin im2col weights)
    # w7_ref:       (9*128, hidden)  bf16
    # wf_ref:       (hidden, hidden) bf16
    # b*_ref:       (1, Cout)        f32
    # o_ref:        (B, hidden)      f32
    B, _ = o_ref.shape
    W = _GRID

    def bias_relu_bf16(acc, b_ref):
        # bias + ReLU in f32 (v5e has no bf16 VPU), then cast so the next
        # layer's slab build moves bf16.
        return jnp.maximum(acc + b_ref[...], 0.0).astype(jnp.bfloat16)

    # ---- c1: one K=4*Cin matmul over the pre-im2col'd input slab -----------
    h = bias_relu_bf16(
        jnp.dot(x_ref[...], w1_ref[...], preferred_element_type=jnp.float32),
        b1_ref)                                             # (R, 128) bf16

    # ---- c2 / c3 / c8: contiguous-offset taps, one K=512 matmul each -------
    def conv2x2(h, w_ref, b_ref):
        M = h.shape[0] - (W + 1)                            # shrink by max tap offset
        M -= M % 8                                          # keep M a multiple of 8
        slab = jnp.concatenate(
            [h[off:off + M, :] for off in (0, 1, W, W + 1)], axis=-1)  # (M, 4*128)
        y = jnp.dot(slab, w_ref[...], preferred_element_type=jnp.float32)
        return bias_relu_bf16(y, b_ref)

    h = conv2x2(h, w2_ref, b2_ref)                          # (R-8,  128)
    h = conv2x2(h, w3_ref, b3_ref)                          # (R-16, 128)
    h = conv2x2(h, w8_ref, b8_ref)                          # (R-24, 128)

    # ---- c7: 3x3 conv as one K=9*128 contraction over contiguous taps ------
    M7 = h.shape[0] - (2 * W + 2)
    M7 -= M7 % 8
    slab7 = jnp.concatenate(
        [h[kh * W + kw: kh * W + kw + M7, :] for kh in range(3) for kw in range(3)],
        axis=-1)                                            # (M7, 9*128) bf16
    y7 = bias_relu_bf16(
        jnp.dot(slab7, w7_ref[...], preferred_element_type=jnp.float32), b7_ref)

    # ---- flatten is a no-op per image -> fc1 + ReLU on the full slab -------
    # (extra garbage rows in M are free on the MXU; gather valid rows once at
    #  the very end)
    yf = jnp.maximum(
        jnp.dot(y7, wf_ref[...], preferred_element_type=jnp.float32) + bf_ref[...],
        0.0)                                                # (M7, hidden) f32

    rows = jnp.concatenate(
        [yf[b * W * W: b * W * W + 1, :] for b in range(B)], axis=0)
    o_ref[...] = rows.astype(o_ref.dtype)


# ------------------------------- wrapper -------------------------------------

def primal_base7_forward(x_nhwc, params):
    # TODO(synk): the optional `cat_end` concatenation branch of fc1 is not
    # implemented (module is configured with cat_end=None).
    B, H, Wd, Cin = x_nhwc.shape
    assert H == _GRID and Wd == _GRID, "fc1 flat size == hidden requires 7x7 input"
    hidden = params["fc1"][0].shape[1]

    # c1 im2col in the 7x7-grid row layout (one row per grid position; the
    # bottom/right positions use zero-padded windows -> garbage rows that no
    # valid downstream output reads).
    xp = jnp.pad(x_nhwc, ((0, 0), (0, 1), (0, 1), (0, 0)))          # (B,8,8,Cin)
    patches = jnp.concatenate(
        [xp[:, kh:kh + H, kw:kw + Wd, :] for kh in range(2) for kw in range(2)],
        axis=-1)                                                    # (B,7,7,4*Cin)
    n_rows = B * H * Wd
    R = _round_up(n_rows, 8)
    x_slab = patches.reshape(n_rows, 4 * Cin)
    x_slab = jnp.pad(x_slab, ((0, R - n_rows), (0, 0))).astype(jnp.bfloat16)

    def wmat(w):                   # (KH,KW,Cin,Cout) -> (KH*KW*Cin, Cout) bf16
        kh, kw, cin, cout = w.shape
        return w.reshape(kh * kw * cin, cout).astype(jnp.bfloat16)

    def brow(b):                   # (Cout,) -> (1, Cout) f32
        return b.reshape(1, -1).astype(jnp.float32)

    args = [x_slab]
    for name in ("c1", "c2", "c3", "c8", "c7"):
        w, b = params[name]
        args += [wmat(w), brow(b)]
    wf, bf = params["fc1"]
    args += [wf.astype(jnp.bfloat16), brow(bf)]

    vmem = pl.BlockSpec(memory_space=pltpu.MemorySpace.VMEM)
    return pl.pallas_call(
        _primal_base7_kernel,
        out_shape=jax.ShapeDtypeStruct((B, hidden), jnp.float32),
        in_specs=[vmem] * len(args),
        out_specs=vmem,
    )(*args)


# ---------------------------- pure-JAX reference ------------------------------

def primal_base7_reference(x_nhwc, params):
    def conv_relu(h, w, b):
        y = jax.lax.conv_general_dilated(
            h, w, (1, 1), "VALID",
            dimension_numbers=("NHWC", "HWIO", "NHWC"))
        return jax.nn.relu(y + b)

    h = conv_relu(x_nhwc, *params["c1"])
    h = conv_relu(h, *params["c2"])
    h = conv_relu(h, *params["c3"])
    h = conv_relu(h, *params["c8"])
    h = conv_relu(h, *params["c7"])
    h = h.reshape(h.shape[0], -1)
    w, b = params["fc1"]
    return jax.nn.relu(h @ w + b)


# --------------------------- parameter creation ------------------------------

def _init_conv(key, kh, kw, cin, cout):
    fan_in = cin * kh * kw
    bound = 1.0 / (fan_in ** 0.5)
    k_w, k_b = jax.random.split(key)
    w = jax.random.uniform(k_w, (kh, kw, cin, cout), jnp.float32, -bound, bound)
    b = jax.random.uniform(k_b, (cout,), jnp.float32, -bound, bound)
    return w, b


def _init_linear(key, din, dout):
    bound = 1.0 / (din ** 0.5)
    k_w, k_b = jax.random.split(key)
    w = jax.random.uniform(k_w, (din, dout), jnp.float32, -bound, bound)
    b = jax.random.uniform(k_b, (dout,), jnp.float32, -bound, bound)
    return w, b


def make_params(key, channels, hidden_dim):
    keys = jax.random.split(key, 6)
    return {
        "c1": _init_conv(keys[0], 2, 2, channels, 128),
        "c2": _init_conv(keys[1], 2, 2, 128, 128),
        "c3": _init_conv(keys[2], 2, 2, 128, 128),
        "c8": _init_conv(keys[3], 2, 2, 128, 128),
        "c7": _init_conv(keys[4], 3, 3, 128, hidden_dim),
        "fc1": _init_linear(keys[5], hidden_dim, hidden_dim),
    }


# --------------------------------- demo --------------------------------------

if __name__ == "__main__":
    key = jax.random.PRNGKey(0)
    # input_dim = (4, 7, 7): spatial 7x7 so c7's output is 1x1 and the flatten
    # width equals hidden_dim, as the module's fc1 requires.
    batch, channels, d1, d2 = 2, 4, 7, 7
    hidden_dim = 32

    kx, kp = jax.random.split(key)
    x_nchw = jax.random.normal(kx, (batch, channels, d1, d2), jnp.float32)
    params = make_params(kp, channels, hidden_dim)

    x_nhwc = jnp.transpose(x_nchw, (0, 2, 3, 1))      # NCHW -> NHWC boundary

    out = jax.jit(primal_base7_forward)(x_nhwc, params)
    out = jax.block_until_ready(out)
    assert out.shape == (batch, hidden_dim), out.shape
    assert bool(jnp.all(jnp.isfinite(out)))

    # Correctness check vs an f32 XLA reference (bf16 MXU operands -> loose tol).
    ref = jax.jit(primal_base7_reference)(x_nhwc, params)
    ref = jax.block_until_ready(ref)
    assert bool(jnp.allclose(out, ref, rtol=1e-1, atol=1e-1)), (
        float(jnp.max(jnp.abs(out - ref))))

    print("KERNEL_OK")
</pallas_src>

<mosaic_0001>
module attributes {stable_mosaic.version = 11 : i64} {
  func.func @_primal_base7_kernel(%arg0: memref<104x16xbf16, #tpu.memory_space<vmem>>, %arg1: memref<16x128xbf16, #tpu.memory_space<vmem>>, %arg2: memref<1x128xf32, #tpu.memory_space<vmem>>, %arg3: memref<512x128xbf16, #tpu.memory_space<vmem>>, %arg4: memref<1x128xf32, #tpu.memory_space<vmem>>, %arg5: memref<512x128xbf16, #tpu.memory_space<vmem>>, %arg6: memref<1x128xf32, #tpu.memory_space<vmem>>, %arg7: memref<512x128xbf16, #tpu.memory_space<vmem>>, %arg8: memref<1x128xf32, #tpu.memory_space<vmem>>, %arg9: memref<1152x32xbf16, #tpu.memory_space<vmem>>, %arg10: memref<1x32xf32, #tpu.memory_space<vmem>>, %arg11: memref<32x32xbf16, #tpu.memory_space<vmem>>, %arg12: memref<1x32xf32, #tpu.memory_space<vmem>>, %arg13: memref<2x32xf32, #tpu.memory_space<vmem>>) attributes {dimension_semantics = [], scalar_prefetch = 0 : i64, scratch_operands = 0 : i64, tpu.core_type = #tpu.core_type<tc>} {
    %c0 = arith.constant 0 : index
    %c0_0 = arith.constant 0 : index
    %0 = vector.load %arg0[%c0, %c0_0] : memref<104x16xbf16, #tpu.memory_space<vmem>>, vector<104x16xbf16>
    %c0_1 = arith.constant 0 : index
    %c0_2 = arith.constant 0 : index
    %1 = vector.load %arg1[%c0_1, %c0_2] : memref<16x128xbf16, #tpu.memory_space<vmem>>, vector<16x128xbf16>
    %cst = arith.constant dense<0.000000e+00> : vector<104x128xf32>
    %2 = tpu.matmul %0, %1, %cst {dimension_numbers = #tpu.dot_dimension_numbers<[1], [0], [0], [1], [0, 0, 1, 1], [], []>} : vector<104x16xbf16>, vector<16x128xbf16>, vector<104x128xf32> -> vector<104x128xf32>
    %c0_3 = arith.constant 0 : index
    %c0_4 = arith.constant 0 : index
    %3 = vector.load %arg2[%c0_3, %c0_4] : memref<1x128xf32, #tpu.memory_space<vmem>>, vector<1x128xf32>
    %4 = vector.broadcast %3 : vector<1x128xf32> to vector<104x128xf32>
    %5 = arith.addf %2, %4 : vector<104x128xf32>
    %cst_5 = arith.constant 0.000000e+00 : f32
    %6 = vector.broadcast %cst_5 : f32 to vector<104x128xf32>
    %7 = arith.maximumf %5, %6 : vector<104x128xf32>
    %8 = arith.truncf %7 : vector<104x128xf32> to vector<104x128xbf16>
    %9 = vector.extract_strided_slice %8 {offsets = [0, 0], sizes = [96, 128], strides = [1, 1]} : vector<104x128xbf16> to vector<96x128xbf16>
    %10 = vector.extract_strided_slice %8 {offsets = [1, 0], sizes = [96, 128], strides = [1, 1]} : vector<104x128xbf16> to vector<96x128xbf16>
    %11 = vector.extract_strided_slice %8 {offsets = [7, 0], sizes = [96, 128], strides = [1, 1]} : vector<104x128xbf16> to vector<96x128xbf16>
    %12 = vector.extract_strided_slice %8 {offsets = [8, 0], sizes = [96, 128], strides = [1, 1]} : vector<104x128xbf16> to vector<96x128xbf16>
    %13 = tpu.concatenate %9, %10, %11, %12 in 1 : vector<96x128xbf16>, vector<96x128xbf16>, vector<96x128xbf16>, vector<96x128xbf16> -> vector<96x512xbf16>
    %c0_6 = arith.constant 0 : index
    %c0_7 = arith.constant 0 : index
    %14 = vector.load %arg3[%c0_6, %c0_7] : memref<512x128xbf16, #tpu.memory_space<vmem>>, vector<512x128xbf16>
    %cst_8 = arith.constant dense<0.000000e+00> : vector<96x128xf32>
    %15 = tpu.matmul %13, %14, %cst_8 {dimension_numbers = #tpu.dot_dimension_numbers<[1], [0], [0], [1], [0, 0, 1, 1], [], []>} : vector<96x512xbf16>, vector<512x128xbf16>, vector<96x128xf32> -> vector<96x128xf32>
    %c0_9 = arith.constant 0 : index
    %c0_10 = arith.constant 0 : index
    %16 = vector.load %arg4[%c0_9, %c0_10] : memref<1x128xf32, #tpu.memory_space<vmem>>, vector<1x128xf32>
    %17 = vector.broadcast %16 : vector<1x128xf32> to vector<96x128xf32>
    %18 = arith.addf %15, %17 : vector<96x128xf32>
    %cst_11 = arith.constant 0.000000e+00 : f32
    %19 = vector.broadcast %cst_11 : f32 to vector<96x128xf32>
    %20 = arith.maximumf %18, %19 : vector<96x128xf32>
    %21 = arith.truncf %20 : vector<96x128xf32> to vector<96x128xbf16>
    %22 = vector.extract_strided_slice %21 {offsets = [0, 0], sizes = [88, 128], strides = [1, 1]} : vector<96x128xbf16> to vector<88x128xbf16>
    %23 = vector.extract_strided_slice %21 {offsets = [1, 0], sizes = [88, 128], strides = [1, 1]} : vector<96x128xbf16> to vector<88x128xbf16>
    %24 = vector.extract_strided_slice %21 {offsets = [7, 0], sizes = [88, 128], strides = [1, 1]} : vector<96x128xbf16> to vector<88x128xbf16>
    %25 = vector.extract_strided_slice %21 {offsets = [8, 0], sizes = [88, 128], strides = [1, 1]} : vector<96x128xbf16> to vector<88x128xbf16>
    %26 = tpu.concatenate %22, %23, %24, %25 in 1 : vector<88x128xbf16>, vector<88x128xbf16>, vector<88x128xbf16>, vector<88x128xbf16> -> vector<88x512xbf16>
    %c0_12 = arith.constant 0 : index
    %c0_13 = arith.constant 0 : index
    %27 = vector.load %arg5[%c0_12, %c0_13] : memref<512x128xbf16, #tpu.memory_space<vmem>>, vector<512x128xbf16>
    %cst_14 = arith.constant dense<0.000000e+00> : vector<88x128xf32>
    %28 = tpu.matmul %26, %27, %cst_14 {dimension_numbers = #tpu.dot_dimension_numbers<[1], [0], [0], [1], [0, 0, 1, 1], [], []>} : vector<88x512xbf16>, vector<512x128xbf16>, vector<88x128xf32> -> vector<88x128xf32>
    %c0_15 = arith.constant 0 : index
    %c0_16 = arith.constant 0 : index
    %29 = vector.load %arg6[%c0_15, %c0_16] : memref<1x128xf32, #tpu.memory_space<vmem>>, vector<1x128xf32>
    %30 = vector.broadcast %29 : vector<1x128xf32> to vector<88x128xf32>
    %31 = arith.addf %28, %30 : vector<88x128xf32>
    %cst_17 = arith.constant 0.000000e+00 : f32
    %32 = vector.broadcast %cst_17 : f32 to vector<88x128xf32>
    %33 = arith.maximumf %31, %32 : vector<88x128xf32>
    %34 = arith.truncf %33 : vector<88x128xf32> to vector<88x128xbf16>
    %35 = vector.extract_strided_slice %34 {offsets = [0, 0], sizes = [80, 128], strides = [1, 1]} : vector<88x128xbf16> to vector<80x128xbf16>
    %36 = vector.extract_strided_slice %34 {offsets = [1, 0], sizes = [80, 128], strides = [1, 1]} : vector<88x128xbf16> to vector<80x128xbf16>
    %37 = vector.extract_strided_slice %34 {offsets = [7, 0], sizes = [80, 128], strides = [1, 1]} : vector<88x128xbf16> to vector<80x128xbf16>
    %38 = vector.extract_strided_slice %34 {offsets = [8, 0], sizes = [80, 128], strides = [1, 1]} : vector<88x128xbf16> to vector<80x128xbf16>
    %39 = tpu.concatenate %35, %36, %37, %38 in 1 : vector<80x128xbf16>, vector<80x128xbf16>, vector<80x128xbf16>, vector<80x128xbf16> -> vector<80x512xbf16>
    %c0_18 = arith.constant 0 : index
    %c0_19 = arith.constant 0 : index
    %40 = vector.load %arg7[%c0_18, %c0_19] : memref<512x128xbf16, #tpu.memory_space<vmem>>, vector<512x128xbf16>
    %cst_20 = arith.constant dense<0.000000e+00> : vector<80x128xf32>
    %41 = tpu.matmul %39, %40, %cst_20 {dimension_numbers = #tpu.dot_dimension_numbers<[1], [0], [0], [1], [0, 0, 1, 1], [], []>} : vector<80x512xbf16>, vector<512x128xbf16>, vector<80x128xf32> -> vector<80x128xf32>
    %c0_21 = arith.constant 0 : index
    %c0_22 = arith.constant 0 : index
    %42 = vector.load %arg8[%c0_21, %c0_22] : memref<1x128xf32, #tpu.memory_space<vmem>>, vector<1x128xf32>
    %43 = vector.broadcast %42 : vector<1x128xf32> to vector<80x128xf32>
    %44 = arith.addf %41, %43 : vector<80x128xf32>
    %cst_23 = arith.constant 0.000000e+00 : f32
    %45 = vector.broadcast %cst_23 : f32 to vector<80x128xf32>
    %46 = arith.maximumf %44, %45 : vector<80x128xf32>
    %47 = arith.truncf %46 : vector<80x128xf32> to vector<80x128xbf16>
    %48 = vector.extract_strided_slice %47 {offsets = [0, 0], sizes = [64, 128], strides = [1, 1]} : vector<80x128xbf16> to vector<64x128xbf16>
    %49 = vector.extract_strided_slice %47 {offsets = [1, 0], sizes = [64, 128], strides = [1, 1]} : vector<80x128xbf16> to vector<64x128xbf16>
    %50 = vector.extract_strided_slice %47 {offsets = [2, 0], sizes = [64, 128], strides = [1, 1]} : vector<80x128xbf16> to vector<64x128xbf16>
    %51 = vector.extract_strided_slice %47 {offsets = [7, 0], sizes = [64, 128], strides = [1, 1]} : vector<80x128xbf16> to vector<64x128xbf16>
    %52 = vector.extract_strided_slice %47 {offsets = [8, 0], sizes = [64, 128], strides = [1, 1]} : vector<80x128xbf16> to vector<64x128xbf16>
    %53 = vector.extract_strided_slice %47 {offsets = [9, 0], sizes = [64, 128], strides = [1, 1]} : vector<80x128xbf16> to vector<64x128xbf16>
    %54 = vector.extract_strided_slice %47 {offsets = [14, 0], sizes = [64, 128], strides = [1, 1]} : vector<80x128xbf16> to vector<64x128xbf16>
    %55 = vector.extract_strided_slice %47 {offsets = [15, 0], sizes = [64, 128], strides = [1, 1]} : vector<80x128xbf16> to vector<64x128xbf16>
    %56 = vector.extract_strided_slice %47 {offsets = [16, 0], sizes = [64, 128], strides = [1, 1]} : vector<80x128xbf16> to vector<64x128xbf16>
    %57 = tpu.concatenate %48, %49, %50, %51, %52, %53, %54, %55, %56 in 1 : vector<64x128xbf16>, vector<64x128xbf16>, vector<64x128xbf16>, vector<64x128xbf16>, vector<64x128xbf16>, vector<64x128xbf16>, vector<64x128xbf16>, vector<64x128xbf16>, vector<64x128xbf16> -> vector<64x1152xbf16>
    %c0_24 = arith.constant 0 : index
    %c0_25 = arith.constant 0 : index
    %58 = vector.load %arg9[%c0_24, %c0_25] : memref<1152x32xbf16, #tpu.memory_space<vmem>>, vector<1152x32xbf16>
    %cst_26 = arith.constant dense<0.000000e+00> : vector<64x32xf32>
    %59 = tpu.matmul %57, %58, %cst_26 {dimension_numbers = #tpu.dot_dimension_numbers<[1], [0], [0], [1], [0, 0, 1, 1], [], []>} : vector<64x1152xbf16>, vector<1152x32xbf16>, vector<64x32xf32> -> vector<64x32xf32>
    %c0_27 = arith.constant 0 : index
    %c0_28 = arith.constant 0 : index
    %60 = vector.load %arg10[%c0_27, %c0_28] : memref<1x32xf32, #tpu.memory_space<vmem>>, vector<1x32xf32>
    %61 = vector.broadcast %60 : vector<1x32xf32> to vector<64x32xf32>
    %62 = arith.addf %59, %61 : vector<64x32xf32>
    %cst_29 = arith.constant 0.000000e+00 : f32
    %63 = vector.broadcast %cst_29 : f32 to vector<64x32xf32>
    %64 = arith.maximumf %62, %63 : vector<64x32xf32>
    %65 = arith.truncf %64 : vector<64x32xf32> to vector<64x32xbf16>
    %c0_30 = arith.constant 0 : index
    %c0_31 = arith.constant 0 : index
    %66 = vector.load %arg11[%c0_30, %c0_31] : memref<32x32xbf16, #tpu.memory_space<vmem>>, vector<32x32xbf16>
    %cst_32 = arith.constant dense<0.000000e+00> : vector<64x32xf32>
    %67 = tpu.matmul %65, %66, %cst_32 {dimension_numbers = #tpu.dot_dimension_numbers<[1], [0], [0], [1], [0, 0, 1, 1], [], []>} : vector<64x32xbf16>, vector<32x32xbf16>, vector<64x32xf32> -> vector<64x32xf32>
    %c0_33 = arith.constant 0 : index
    %c0_34 = arith.constant 0 : index
    %68 = vector.load %arg12[%c0_33, %c0_34] : memref<1x32xf32, #tpu.memory_space<vmem>>, vector<1x32xf32>
    %69 = vector.broadcast %68 : vector<1x32xf32> to vector<64x32xf32>
    %70 = arith.addf %67, %69 : vector<64x32xf32>
    %cst_35 = arith.constant 0.000000e+00 : f32
    %71 = vector.broadcast %cst_35 : f32 to vector<64x32xf32>
    %72 = arith.maximumf %70, %71 : vector<64x32xf32>
    %73 = vector.extract_strided_slice %72 {offsets = [0, 0], sizes = [1, 32], strides = [1, 1]} : vector<64x32xf32> to vector<1x32xf32>
    %74 = vector.extract_strided_slice %72 {offsets = [49, 0], sizes = [1, 32], strides = [1, 1]} : vector<64x32xf32> to vector<1x32xf32>
    %75 = tpu.concatenate %73, %74 in 0 : vector<1x32xf32>, vector<1x32xf32> -> vector<2x32xf32>
    %c0_36 = arith.constant 0 : index
    %c0_37 = arith.constant 0 : index
    %76 = vector.load %arg13[%c0_36, %c0_37] : memref<2x32xf32, #tpu.memory_space<vmem>>, vector<2x32xf32>
    tpu.vector_store %arg13[%c0_36, %c0_37], %75 {strides = array<i32>} : memref<2x32xf32, #tpu.memory_space<vmem>>, vector<2x32xf32>,
    return
  }
}

</mosaic_0001>

<llo_original>
// kernel: primal_base7_forward.1
$region0: #{primal_base7_forward.1}
  #allocation0 [shape = 'u32[]', space=smem, size = 0x4, offset = 0x4, fixed_abs, tag = 'smem constant byte address 0x4 - core index']
  #allocation1 [shape = 'u32[144,128]{1,0:T(1,128)}', space=vmem, size = 0x12000, scoped, tag = 'internal scratch']
  %s0 = inlined_call_operand.vmem [shape: bf16[104,16], index: 0, kind: input, shape index: {}]
  %s1 = inlined_call_operand.vmem [shape: bf16[16,128], index: 1, kind: input, shape index: {}]
  %s2 = inlined_call_operand.vmem [shape: f32[1,128], index: 2, kind: input, shape index: {}]
  %s3 = inlined_call_operand.vmem [shape: bf16[512,128], index: 3, kind: input, shape index: {}]
  %s4 = inlined_call_operand.vmem [shape: f32[1,128], index: 4, kind: input, shape index: {}]
  %s5 = inlined_call_operand.vmem [shape: bf16[512,128], index: 5, kind: input, shape index: {}]
  %s6 = inlined_call_operand.vmem [shape: f32[1,128], index: 6, kind: input, shape index: {}]
  %s7 = inlined_call_operand.vmem [shape: bf16[512,128], index: 7, kind: input, shape index: {}]
  %s8 = inlined_call_operand.vmem [shape: f32[1,128], index: 8, kind: input, shape index: {}]
  %s9 = inlined_call_operand.vmem [shape: bf16[1152,32], index: 9, kind: input, shape index: {}]
  %s10 = inlined_call_operand.vmem [shape: f32[1,32], index: 10, kind: input, shape index: {}]
  %s11 = inlined_call_operand.vmem [shape: bf16[32,32], index: 11, kind: input, shape index: {}]
  %s12 = inlined_call_operand.vmem [shape: f32[1,32], index: 12, kind: input, shape index: {}]
  %s13 = inlined_call_operand.hbm [shape: f32[2,32], index: 13, kind: output, shape index: {}]
  %s14 = sld [smem:[#allocation0]]
  $region62: #{primal_base7_forward.1} parent=0
    _
  %s16 = ssub.s32 1, %s14
  %s17 = scalar_select 0, %s16, %s14
  $region1: #{primal_base7_forward.1} parent=0
    #allocation2 [shape = 'u8[1024]{0}', space=vmem, size = 0x400, scoped, tag = 'output window, operand 0, single buffered']
    #allocation3 [shape = 's32[1]{0}', space=sflag, size = 0x4, scoped, tag = 'scoped memory for primal_base7_forward.1']
    %18 = vsyncpa [#allocation3], 0
    // Predicated region
    $region2: #{primal_base7_forward.1} parent=1 // pred_check
      _
    $region3: #{primal_base7_forward.1} parent=1 // pred_check_branch
      %20 = sbr.rel (0) target = $region5
    $region4: #{primal_base7_forward.1} parent=1 // pred_region
      _
    $region5: #{primal_base7_forward.1} parent=1 // pred_fallthru
      _
    // Predicated region
    $region6: #{primal_base7_forward.1} parent=1 // pred_check
      _
    $region7: #{primal_base7_forward.1} parent=1 // pred_check_branch
      %22 = sbr.rel (0) target = $region9
    $region8: #{primal_base7_forward.1} parent=1 // pred_region
      _
    $region9: #{primal_base7_forward.1} parent=1 // pred_fallthru
      _
    // Predicated region
    $region10: #{primal_base7_forward.1} parent=1 // pred_check
      _
    $region11: #{primal_base7_forward.1} parent=1 // pred_check_branch
      %24 = sbr.rel (0) target = $region13
    $region12: #{primal_base7_forward.1} parent=1 // pred_region
      _
    $region13: #{primal_base7_forward.1} parent=1 // pred_fallthru
      _
    // Predicated region
    $region14: #{primal_base7_forward.1} parent=1 // pred_check
      _
    $region15: #{primal_base7_forward.1} parent=1 // pred_check_branch
      %26 = sbr.rel (0) target = $region17
    $region16: #{primal_base7_forward.1} parent=1 // pred_region
      _
    $region17: #{primal_base7_forward.1} parent=1 // pred_fallthru
      _
    // Predicated region
    $region18: #{primal_base7_forward.1} parent=1 // pred_check
      _
    $region19: #{primal_base7_forward.1} parent=1 // pred_check_branch
      %28 = sbr.rel (0) target = $region21
    $region20: #{primal_base7_forward.1} parent=1 // pred_region
      _
    $region21: #{primal_base7_forward.1} parent=1 // pred_fallthru
      _
    // Predicated region
    $region22: #{primal_base7_forward.1} parent=1 // pred_check
      _
    $region23: #{primal_base7_forward.1} parent=1 // pred_check_branch
      %30 = sbr.rel (0) target = $region25
    $region24: #{primal_base7_forward.1} parent=1 // pred_region
      _
    $region25: #{primal_base7_forward.1} parent=1 // pred_fallthru
      _
    // Predicated region
    $region26: #{primal_base7_forward.1} parent=1 // pred_check
      _
    $region27: #{primal_base7_forward.1} parent=1 // pred_check_branch
      %32 = sbr.rel (0) target = $region29
    $region28: #{primal_base7_forward.1} parent=1 // pred_region
      _
    $region29: #{primal_base7_forward.1} parent=1 // pred_fallthru
      _
    // Predicated region
    $region30: #{primal_base7_forward.1} parent=1 // pred_check
      _
    $region31: #{primal_base7_forward.1} parent=1 // pred_check_branch
      %34 = sbr.rel (0) target = $region33
    $region32: #{primal_base7_forward.1} parent=1 // pred_region
      _
    $region33: #{primal_base7_forward.1} parent=1 // pred_fallthru
      _
    // Predicated region
    $region34: #{primal_base7_forward.1} parent=1 // pred_check
      _
    $region35: #{primal_base7_forward.1} parent=1 // pred_check_branch
      %36 = sbr.rel (0) target = $region37
    $region36: #{primal_base7_forward.1} parent=1 // pred_region
      _
    $region37: #{primal_base7_forward.1} parent=1 // pred_fallthru
      _
    // Predicated region
    $region38: #{primal_base7_forward.1} parent=1 // pred_check
      _
    $region39: #{primal_base7_forward.1} parent=1 // pred_check_branch
      %38 = sbr.rel (0) target = $region41
    $region40: #{primal_base7_forward.1} parent=1 // pred_region
      _
    $region41: #{primal_base7_forward.1} parent=1 // pred_fallthru
      _
    // Predicated region
    $region42: #{primal_base7_forward.1} parent=1 // pred_check
      _
    $region43: #{primal_base7_forward.1} parent=1 // pred_check_branch
      %40 = sbr.rel (0) target = $region45
    $region44: #{primal_base7_forward.1} parent=1 // pred_region
      _
    $region45: #{primal_base7_forward.1} parent=1 // pred_fallthru
      _
    // Predicated region
    $region46: #{primal_base7_forward.1} parent=1 // pred_check
      _
    $region47: #{primal_base7_forward.1} parent=1 // pred_check_branch
      %42 = sbr.rel (0) target = $region49
    $region48: #{primal_base7_forward.1} parent=1 // pred_region
      _
    $region49: #{primal_base7_forward.1} parent=1 // pred_fallthru
      _
    // Predicated region
    $region50: #{primal_base7_forward.1} parent=1 // pred_check
      _
    $region51: #{primal_base7_forward.1} parent=1 // pred_check_branch
      %44 = sbr.rel (0) target = $region53
    $region52: #{primal_base7_forward.1} parent=1 // pred_region
      _
    $region53: #{primal_base7_forward.1} parent=1 // pred_fallthru
      _
    %v46 = vld [vmem:[%s0] sm:$0xf]
    %v47 = vld [vmem:[%s0 + $0x4] sm:$0xf]
    %v48 = vld [vmem:[%s0 + $0x8] sm:$0xf]
    %v49 = vld [vmem:[%s0 + $0xc] sm:$0xf]
    %v50 = vld [vmem:[%s0 + $0x10] sm:$0xf]
    %v51 = vld [vmem:[%s0 + $0x14] sm:$0xf]
    %v52 = vld [vmem:[%s0 + $0x18] sm:$0xf]
    %v53 = vld [vmem:[%s0 + $0x1c] sm:$0xf]
    %v54 = vld [vmem:[%s0 + $0x20] sm:$0xf]
    %v55 = vld [vmem:[%s0 + $0x24] sm:$0xf]
    %v56 = vld [vmem:[%s0 + $0x28] sm:$0xf]
    %v57 = vld [vmem:[%s0 + $0x2c] sm:$0xf]
    %v58 = vld [vmem:[%s0 + $0x30] sm:$0xf]
    %v59 = vld [vmem:[%s1] sm:$0xf]
    %v60 = vld [vmem:[%s1 + $0x4] sm:$0xf]
    %v61 = vld [vmem:[%s2] sm:$0x1]
    %v63 = vlaneseq
    %v64 = vshrl.u32 %v63, 7
    %v65 = vsub.s32 0, %v64
    %v66 = vrot.slane %v61, %v65
    %v81 = vunpack.c.l.b16 %v46
    %v82 = vunpack.c.l.b16 %v47
    %v83 = vunpack.c.l.b16 %v48
    %v84 = vunpack.c.l.b16 %v49
    %v85 = vunpack.c.l.b16 %v50
    %v86 = vunpack.c.l.b16 %v51
    %v87 = vunpack.c.l.b16 %v52
    %v88 = vunpack.c.l.b16 %v53
    %v89 = vunpack.c.l.b16 %v54
    %v90 = vunpack.c.l.b16 %v55
    %v91 = vunpack.c.l.b16 %v56
    %v92 = vunpack.c.l.b16 %v57
    %v93 = vunpack.c.l.b16 %v58
    %v94 = vpack.c.b16 %v82, %v81
    %v95 = vpack.c.b16 %v84, %v83
    %v96 = vpack.c.b16 %v86, %v85
    %v97 = vpack.c.b16 %v88, %v87
    %v98 = vpack.c.b16 %v90, %v89
    %v99 = vpack.c.b16 %v92, %v91
    %v100 = vpack.c.b16 %v93, %v93
    %v103 = vunpack.c.l.b16 %v59
    %v104 = vunpack.c.l.b16 %v60
    %v105 = vpack.c.b16 %v104, %v103
    %vm107 = vcmask 130048
    %v109 = vsel %vm107, %v94, 0
    %v112 = vsel %vm107, %v95, 0
    %v115 = vsel %vm107, %v96, 0
    %v118 = vsel %vm107, %v97, 0
    %v121 = vsel %vm107, %v98, 0
    %v124 = vsel %vm107, %v99, 0
    %v127 = vsel %vm107, %v100, 0
    %129 = vmatprep.subr.bf16.mxu0 0
    %130 = vmatpush1.bf16.msra.mxu0 0
    %131 = vmatprep.subr.bf16.mxu0 0
    %132 = vmatpush1.bf16.msra.mxu0 0
    %133 = vmatprep.subr.bf16.mxu0 0
    %134 = vmatpush1.bf16.msra.mxu0 0
    %135 = vmatprep.subr.bf16.mxu0 0
    %136 = vmatpush1.bf16.msra.mxu0 0
    %137 = vmatprep.subr.bf16.mxu0 0
    %138 = vmatpush1.bf16.msra.mxu0 0
    %139 = vmatprep.subr.bf16.mxu0 0
    %140 = vmatpush1.bf16.msra.mxu0 0
    %141 = vmatprep.subr.bf16.mxu0 0
    %142 = vmatpush1.bf16.msra.mxu0 0
    %143 = vmatprep.subr.bf16.mxu0 0
    %144 = vmatpush1.bf16.msra.mxu0 %v105
    %145 = vmatprep.subr.bf16.mxu0 0
    %146 = vmatpush2.bf16.msra.mxu0 0
    %147 = vmatprep.subr.bf16.mxu0 0
    %148 = vmatpush2.bf16.msra.mxu0 0
    %149 = vmatprep.subr.bf16.mxu0 0
    %150 = vmatpush2.bf16.msra.mxu0 0
    %151 = vmatprep.subr.bf16.mxu0 0
    %152 = vmatpush2.bf16.msra.mxu0 0
    %153 = vmatprep.subr.bf16.mxu0 0
    %154 = vmatpush2.bf16.msra.mxu0 0
    %155 = vmatprep.subr.bf16.mxu0 0
    %156 = vmatpush2.bf16.msra.mxu0 0
    %157 = vmatprep.subr.bf16.mxu0 0
    %158 = vmatpush2.bf16.msra.mxu0 0
    %159 = vmatprep.subr.bf16.mxu0 0
    %160 = vmatpush2.bf16.msra.mxu0 0
    %161 = vmatprep.mubr.bf16.mxu0 0
    %162 = vmatmul.mubr.bf16.gmra.mxu0 %v109
    %v163 = vpop.f32.mrf.mxu0
    %v164 = vadd.f32 %v66, %v163
    %v165 = vpop.f32.mrf.mxu0
    %v166 = vpop.f32.mrf.mxu0
    %v167 = vadd.f32 %v66, %v166
    %v168 = vpop.f32.mrf.mxu0
    %169 = vmatprep.mubr.bf16.mxu0 0
    %170 = vmatmul.mubr.bf16.gmra.mxu0 %v112
    %v171 = vpop.f32.mrf.mxu0
    %v172 = vadd.f32 %v66, %v171
    %v173 = vpop.f32.mrf.mxu0
    %v174 = vpop.f32.mrf.mxu0
    %v175 = vadd.f32 %v66, %v174
    %v176 = vpop.f32.mrf.mxu0
    %177 = vmatprep.mubr.bf16.mxu0 0
    %178 = vmatmul.mubr.bf16.gmra.mxu0 %v115
    %v179 = vpop.f32.mrf.mxu0
    %v180 = vadd.f32 %v66, %v179
    %v181 = vpop.f32.mrf.mxu0
    %v182 = vpop.f32.mrf.mxu0
    %v183 = vadd.f32 %v66, %v182
    %v184 = vpop.f32.mrf.mxu0
    %185 = vmatprep.mubr.bf16.mxu0 0
    %186 = vmatmul.mubr.bf16.gmra.mxu0 %v118
    %v187 = vpop.f32.mrf.mxu0
    %v188 = vadd.f32 %v66, %v187
    %v189 = vpop.f32.mrf.mxu0
    %v190 = vpop.f32.mrf.mxu0
    %v191 = vadd.f32 %v66, %v190
    %v192 = vpop.f32.mrf.mxu0
    %193 = vmatprep.mubr.bf16.mxu0 0
    %194 = vmatmul.mubr.bf16.gmra.mxu0 %v121
    %v195 = vpop.f32.mrf.mxu0
    %v196 = vadd.f32 %v66, %v195
    %v197 = vpop.f32.mrf.mxu0
    %v198 = vpop.f32.mrf.mxu0
    %v199 = vadd.f32 %v66, %v198
    %v200 = vpop.f32.mrf.mxu0
    %201 = vmatprep.mubr.bf16.mxu0 0
    %202 = vmatmul.mubr.bf16.gmra.mxu0 %v124
    %v203 = vpop.f32.mrf.mxu0
    %v204 = vadd.f32 %v66, %v203
    %v205 = vpop.f32.mrf.mxu0
    %v206 = vpop.f32.mrf.mxu0
    %v207 = vadd.f32 %v66, %v206
    %v208 = vpop.f32.mrf.mxu0
    %209 = vmatprep.mubr.bf16.mxu0 0
    %210 = vmatmul.mubr.bf16.gmra.mxu0 %v127
    %v211 = vpop.f32.mrf.mxu0
    %v212 = vadd.f32 %v66, %v211
    %v213 = vpop.f32.mrf.mxu0
    %v214 = vpop.f32.mrf.mxu0
    %v215 = vpop.f32.mrf.mxu0
    %216 = vdwg.mxu0
    %v217 = vmax.f32 %v164, 0.0
    %v218 = vmax.f32 %v167, 0.0
    %v219 = vmax.f32 %v172, 0.0
    %v220 = vmax.f32 %v175, 0.0
    %v221 = vmax.f32 %v180, 0.0
    %v222 = vmax.f32 %v183, 0.0
    %v223 = vmax.f32 %v188, 0.0
    %v224 = vmax.f32 %v191, 0.0
    %v225 = vmax.f32 %v196, 0.0
    %v226 = vmax.f32 %v199, 0.0
    %v227 = vmax.f32 %v204, 0.0
    %v228 = vmax.f32 %v207, 0.0
    %v229 = vmax.f32 %v212, 0.0
    %v230 = vpack.c.bf16 %v218, %v217
    %v231 = vpack.c.bf16 %v220, %v219
    %v232 = vpack.c.bf16 %v222, %v221
    %v233 = vpack.c.bf16 %v224, %v223
    %v234 = vpack.c.bf16 %v226, %v225
    %v235 = vpack.c.bf16 %v228, %v227
    %v236 = vpack.c.bf16 %v229, %v229
    %vm237 = vsmask.f32 7424
    %v239 = vshrl.u32 %v230, 16
    %v241 = vshll.u32 %v230, 16
    %v243 = vrot.slane %v241, 1
    %v244 = vor.u32 %v239, %v243
    %v246 = vshll.u32 %v231, 16
    %v248 = vrot.slane %v246, 1
    %v249 = vsel %vm237, %v244, %v248
    %v250 = vshrl.u32 %v231, 16
    %v252 = vor.u32 %v250, %v248
    %v254 = vshll.u32 %v232, 16
    %v256 = vrot.slane %v254, 1
    %v257 = vsel %vm237, %v252, %v256
    %v258 = vshrl.u32 %v232, 16
    %v260 = vor.u32 %v258, %v256
    %v262 = vshll.u32 %v233, 16
    %v264 = vrot.slane %v262, 1
    %v265 = vsel %vm237, %v260, %v264
    %v266 = vshrl.u32 %v233, 16
    %v268 = vor.u32 %v266, %v264
    %v270 = vshll.u32 %v234, 16
    %v272 = vrot.slane %v270, 1
    %v273 = vsel %vm237, %v268, %v272
    %v274 = vshrl.u32 %v234, 16
    %v276 = vor.u32 %v274, %v272
    %v278 = vshll.u32 %v235, 16
    %v280 = vrot.slane %v278, 1
    %v281 = vsel %vm237, %v276, %v280
    %v282 = vshrl.u32 %v235, 16
    %v284 = vor.u32 %v282, %v280
    %v286 = vshll.u32 %v236, 16
    %v288 = vrot.slane %v286, 1
    %v289 = vsel %vm237, %v284, %v288
    %vm296 = vsmask.f32 4352
    %v297 = vrot.slane %v239, 3
    %v298 = vrot.slane %v241, 4
    %v299 = vor.u32 %v297, %v298
    %v300 = vrot.slane %v250, 3
    %v301 = vrot.slane %v246, 4
    %v302 = vor.u32 %v300, %v301
    %v303 = vsel %vm296, %v299, %v302
    %v304 = vrot.slane %v258, 3
    %v305 = vrot.slane %v254, 4
    %v306 = vor.u32 %v304, %v305
    %v307 = vsel %vm296, %v302, %v306
    %v308 = vrot.slane %v266, 3
    %v309 = vrot.slane %v262, 4
    %v310 = vor.u32 %v308, %v309
    %v311 = vsel %vm296, %v306, %v310
    %v312 = vrot.slane %v274, 3
    %v313 = vrot.slane %v270, 4
    %v314 = vor.u32 %v312, %v313
    %v315 = vsel %vm296, %v310, %v314
    %v316 = vrot.slane %v282, 3
    %v317 = vrot.slane %v278, 4
    %v318 = vor.u32 %v316, %v317
    %v319 = vsel %vm296, %v314, %v318
    %v320 = vshrl.u32 %v236, 16
    %v322 = vrot.slane %v320, 3
    %v323 = vrot.slane %v286, 4
    %v324 = vor.u32 %v322, %v323
    %v325 = vsel %vm296, %v318, %v324
    %vm339 = vcmask 1043456
    %v340 = vrot.slane %v230, 4
    %v341 = vrot.slane %v231, 4
    %v342 = vsel %vm339, %v340, %v341
    %v343 = vrot.slane %v232, 4
    %v344 = vsel %vm339, %v341, %v343
    %v345 = vrot.slane %v233, 4
    %v346 = vsel %vm339, %v343, %v345
    %v347 = vrot.slane %v234, 4
    %v348 = vsel %vm339, %v345, %v347
    %v349 = vrot.slane %v235, 4
    %v350 = vsel %vm339, %v347, %v349
    %v351 = vrot.slane %v236, 4
    %v352 = vsel %vm339, %v349, %v351
    %v359 = vld [vmem:[%s3] sm:$0xf]
    %v360 = vld [vmem:[%s3 + $0x4] sm:$0xf]
    %v361 = vld [vmem:[%s3 + $0x8] sm:$0xf]
    %v362 = vld [vmem:[%s3 + $0xc] sm:$0xf]
    %v363 = vld [vmem:[%s3 + $0x10] sm:$0xf]
    %v364 = vld [vmem:[%s3 + $0x14] sm:$0xf]
    %v365 = vld [vmem:[%s3 + $0x18] sm:$0xf]
    %v366 = vld [vmem:[%s3 + $0x1c] sm:$0xf]
    %v367 = vld [vmem:[%s3 + $0x20] sm:$0xf]
    %v368 = vld [vmem:[%s3 + $0x24] sm:$0xf]
    %v369 = vld [vmem:[%s3 + $0x28] sm:$0xf]
    %v370 = vld [vmem:[%s3 + $0x2c] sm:$0xf]
    %v371 = vld [vmem:[%s3 + $0x30] sm:$0xf]
    %v372 = vld [vmem:[%s3 + $0x34] sm:$0xf]
    %v373 = vld [vmem:[%s3 + $0x38] sm:$0xf]
    %v374 = vld [vmem:[%s3 + $0x3c] sm:$0xf]
    %v375 = vld [vmem:[%s3 + $0x40] sm:$0xf]
    %v376 = vld [vmem:[%s3 + $0x44] sm:$0xf]
    %v377 = vld [vmem:[%s3 + $0x48] sm:$0xf]
    %v378 = vld [vmem:[%s3 + $0x4c] sm:$0xf]
    %v379 = vld [vmem:[%s3 + $0x50] sm:$0xf]
    %v380 = vld [vmem:[%s3 + $0x54] sm:$0xf]
    %v381 = vld [vmem:[%s3 + $0x58] sm:$0xf]
    %v382 = vld [vmem:[%s3 + $0x5c] sm:$0xf]
    %v383 = vld [vmem:[%s3 + $0x60] sm:$0xf]
    %v384 = vld [vmem:[%s3 + $0x64] sm:$0xf]
    %v385 = vld [vmem:[%s3 + $0x68] sm:$0xf]
    %v386 = vld [vmem:[%s3 + $0x6c] sm:$0xf]
    %v387 = vld [vmem:[%s3 + $0x70] sm:$0xf]
    %v388 = vld [vmem:[%s3 + $0x74] sm:$0xf]
    %v389 = vld [vmem:[%s3 + $0x78] sm:$0xf]
    %v390 = vld [vmem:[%s3 + $0x7c] sm:$0xf]
    %v391 = vld [vmem:[%s3 + $0x80] sm:$0xf]
    %v392 = vld [vmem:[%s3 + $0x84] sm:$0xf]
    %v393 = vld [vmem:[%s3 + $0x88] sm:$0xf]
    %v394 = vld [vmem:[%s3 + $0x8c] sm:$0xf]
    %v395 = vld [vmem:[%s3 + $0x90] sm:$0xf]
    %v396 = vld [vmem:[%s3 + $0x94] sm:$0xf]
    %v397 = vld [vmem:[%s3 + $0x98] sm:$0xf]
    %v398 = vld [vmem:[%s3 + $0x9c] sm:$0xf]
    %v399 = vld [vmem:[%s3 + $0xa0] sm:$0xf]
    %v400 = vld [vmem:[%s3 + $0xa4] sm:$0xf]
    %v401 = vld [vmem:[%s3 + $0xa8] sm:$0xf]
    %v402 = vld [vmem:[%s3 + $0xac] sm:$0xf]
    %v403 = vld [vmem:[%s3 + $0xb0] sm:$0xf]
    %v404 = vld [vmem:[%s3 + $0xb4] sm:$0xf]
    %v405 = vld [vmem:[%s3 + $0xb8] sm:$0xf]
    %v406 = vld [vmem:[%s3 + $0xbc] sm:$0xf]
    %v407 = vld [vmem:[%s3 + $0xc0] sm:$0xf]
    %v408 = vld [vmem:[%s3 + $0xc4] sm:$0xf]
    %v409 = vld [vmem:[%s3 + $0xc8] sm:$0xf]
    %v410 = vld [vmem:[%s3 + $0xcc] sm:$0xf]
    %v411 = vld [vmem:[%s3 + $0xd0] sm:$0xf]
    %v412 = vld [vmem:[%s3 + $0xd4] sm:$0xf]
    %v413 = vld [vmem:[%s3 + $0xd8] sm:$0xf]
    %v414 = vld [vmem:[%s3 + $0xdc] sm:$0xf]
    %v415 = vld [vmem:[%s3 + $0xe0] sm:$0xf]
    %v416 = vld [vmem:[%s3 + $0xe4] sm:$0xf]
    %v417 = vld [vmem:[%s3 + $0xe8] sm:$0xf]
    %v418 = vld [vmem:[%s3 + $0xec] sm:$0xf]
    %v419 = vld [vmem:[%s3 + $0xf0] sm:$0xf]
    %v420 = vld [vmem:[%s3 + $0xf4] sm:$0xf]
    %v421 = vld [vmem:[%s3 + $0xf8] sm:$0xf]
    %v422 = vld [vmem:[%s3 + $0xfc] sm:$0xf]
    %v423 = vld [vmem:[%s4] sm:$0x1]
    %v425 = vlaneseq
    %v426 = vshrl.u32 %v425, 7
    %v427 = vsub.s32 0, %v426
    %v428 = vrot.slane %v423, %v427
    %v494 = vunpack.c.l.b16 %v359
    %v495 = vunpack.c.l.b16 %v360
    %v496 = vunpack.c.l.b16 %v361
    %v497 = vunpack.c.l.b16 %v362
    %v498 = vunpack.c.l.b16 %v363
    %v499 = vunpack.c.l.b16 %v364
    %v500 = vunpack.c.l.b16 %v365
    %v501 = vunpack.c.l.b16 %v366
    %v502 = vunpack.c.l.b16 %v367
    %v503 = vunpack.c.l.b16 %v368
    %v504 = vunpack.c.l.b16 %v369
    %v505 = vunpack.c.l.b16 %v370
    %v506 = vunpack.c.l.b16 %v371
    %v507 = vunpack.c.l.b16 %v372
    %v508 = vunpack.c.l.b16 %v373
    %v509 = vunpack.c.l.b16 %v374
    %v510 = vunpack.c.l.b16 %v375
    %v511 = vunpack.c.l.b16 %v376
    %v512 = vunpack.c.l.b16 %v377
    %v513 = vunpack.c.l.b16 %v378
    %v514 = vunpack.c.l.b16 %v379
    %v515 = vunpack.c.l.b16 %v380
    %v516 = vunpack.c.l.b16 %v381
    %v517 = vunpack.c.l.b16 %v382
    %v518 = vunpack.c.l.b16 %v383
    %v519 = vunpack.c.l.b16 %v384
    %v520 = vunpack.c.l.b16 %v385
    %v521 = vunpack.c.l.b16 %v386
    %v522 = vunpack.c.l.b16 %v387
    %v523 = vunpack.c.l.b16 %v388
    %v524 = vunpack.c.l.b16 %v389
    %v525 = vunpack.c.l.b16 %v390
    %v526 = vunpack.c.l.b16 %v391
    %v527 = vunpack.c.l.b16 %v392
    %v528 = vunpack.c.l.b16 %v393
    %v529 = vunpack.c.l.b16 %v394
    %v530 = vunpack.c.l.b16 %v395
    %v531 = vunpack.c.l.b16 %v396
    %v532 = vunpack.c.l.b16 %v397
    %v533 = vunpack.c.l.b16 %v398
    %v534 = vunpack.c.l.b16 %v399
    %v535 = vunpack.c.l.b16 %v400
    %v536 = vunpack.c.l.b16 %v401
    %v537 = vunpack.c.l.b16 %v402
    %v538 = vunpack.c.l.b16 %v403
    %v539 = vunpack.c.l.b16 %v404
    %v540 = vunpack.c.l.b16 %v405
    %v541 = vunpack.c.l.b16 %v406
    %v542 = vunpack.c.l.b16 %v407
    %v543 = vunpack.c.l.b16 %v408
    %v544 = vunpack.c.l.b16 %v409
    %v545 = vunpack.c.l.b16 %v410
    %v546 = vunpack.c.l.b16 %v411
    %v547 = vunpack.c.l.b16 %v412
    %v548 = vunpack.c.l.b16 %v413
    %v549 = vunpack.c.l.b16 %v414
    %v550 = vunpack.c.l.b16 %v415
    %v551 = vunpack.c.l.b16 %v416
    %v552 = vunpack.c.l.b16 %v417
    %v553 = vunpack.c.l.b16 %v418
    %v554 = vunpack.c.l.b16 %v419
    %v555 = vunpack.c.l.b16 %v420
    %v556 = vunpack.c.l.b16 %v421
    %v557 = vunpack.c.l.b16 %v422
    %v558 = vpack.c.b16 %v495, %v494
    %v559 = vpack.c.b16 %v497, %v496
    %v560 = vpack.c.b16 %v499, %v498
    %v561 = vpack.c.b16 %v501, %v500
    %v562 = vpack.c.b16 %v503, %v502
    %v563 = vpack.c.b16 %v505, %v504
    %v564 = vpack.c.b16 %v507, %v506
    %v565 = vpack.c.b16 %v509, %v508
    %v566 = vpack.c.b16 %v511, %v510
    %v567 = vpack.c.b16 %v513, %v512
    %v568 = vpack.c.b16 %v515, %v514
    %v569 = vpack.c.b16 %v517, %v516
    %v570 = vpack.c.b16 %v519, %v518
    %v571 = vpack.c.b16 %v521, %v520
    %v572 = vpack.c.b16 %v523, %v522
    %v573 = vpack.c.b16 %v525, %v524
    %v574 = vpack.c.b16 %v527, %v526
    %v575 = vpack.c.b16 %v529, %v528
    %v576 = vpack.c.b16 %v531, %v530
    %v577 = vpack.c.b16 %v533, %v532
    %v578 = vpack.c.b16 %v535, %v534
    %v579 = vpack.c.b16 %v537, %v536
    %v580 = vpack.c.b16 %v539, %v538
    %v581 = vpack.c.b16 %v541, %v540
    %v582 = vpack.c.b16 %v543, %v542
    %v583 = vpack.c.b16 %v545, %v544
    %v584 = vpack.c.b16 %v547, %v546
    %v585 = vpack.c.b16 %v549, %v548
    %v586 = vpack.c.b16 %v551, %v550
    %v587 = vpack.c.b16 %v553, %v552
    %v588 = vpack.c.b16 %v555, %v554
    %v589 = vpack.c.b16 %v557, %v556
    %622 = vmatprep.subr.bf16.mxu0 0
    %623 = vmatpush1.bf16.msra.mxu0 %v565
    %624 = vmatprep.subr.bf16.mxu0 0
    %625 = vmatpush1.bf16.msra.mxu0 %v564
    %626 = vmatprep.subr.bf16.mxu0 0
    %627 = vmatpush1.bf16.msra.mxu0 %v563
    %628 = vmatprep.subr.bf16.mxu0 0
    %629 = vmatpush1.bf16.msra.mxu0 %v562
    %630 = vmatprep.subr.bf16.mxu0 0
    %631 = vmatpush1.bf16.msra.mxu0 %v561
    %632 = vmatprep.subr.bf16.mxu0 0
    %633 = vmatpush1.bf16.msra.mxu0 %v560
    %634 = vmatprep.subr.bf16.mxu0 0
    %635 = vmatpush1.bf16.msra.mxu0 %v559
    %636 = vmatprep.subr.bf16.mxu0 0
    %637 = vmatpush1.bf16.msra.mxu0 %v558
    %638 = vmatprep.subr.bf16.mxu0 0
    %639 = vmatpush2.bf16.msra.mxu0 %v573
    %640 = vmatprep.subr.bf16.mxu0 0
    %641 = vmatpush2.bf16.msra.mxu0 %v572
    %642 = vmatprep.subr.bf16.mxu0 0
    %643 = vmatpush2.bf16.msra.mxu0 %v571
    %644 = vmatprep.subr.bf16.mxu0 0
    %645 = vmatpush2.bf16.msra.mxu0 %v570
    %646 = vmatprep.subr.bf16.mxu0 0
    %647 = vmatpush2.bf16.msra.mxu0 %v569
    %648 = vmatprep.subr.bf16.mxu0 0
    %649 = vmatpush2.bf16.msra.mxu0 %v568
    %650 = vmatprep.subr.bf16.mxu0 0
    %651 = vmatpush2.bf16.msra.mxu0 %v567
    %652 = vmatprep.subr.bf16.mxu0 0
    %653 = vmatpush2.bf16.msra.mxu0 %v566
    %654 = vmatprep.mubr.bf16.mxu0 %v249
    %655 = vmatmul.mubr.bf16.gmra.mxu0 %v230
    %v656 = vpop.f32.mrf.mxu0
    %v657 = vadd.f32 %v428, %v656
    %v658 = vpop.f32.mrf.mxu0
    %v659 = vpop.f32.mrf.mxu0
    %v660 = vadd.f32 %v428, %v659
    %v661 = vpop.f32.mrf.mxu0
    %662 = vmatprep.mubr.bf16.mxu0 %v257
    %663 = vmatmul.mubr.bf16.gmra.mxu0 %v231
    %v664 = vpop.f32.mrf.mxu0
    %v665 = vadd.f32 %v428, %v664
    %v666 = vpop.f32.mrf.mxu0
    %v667 = vpop.f32.mrf.mxu0
    %v668 = vadd.f32 %v428, %v667
    %v669 = vpop.f32.mrf.mxu0
    %670 = vmatprep.mubr.bf16.mxu0 %v265
    %671 = vmatmul.mubr.bf16.gmra.mxu0 %v232
    %v672 = vpop.f32.mrf.mxu0
    %v673 = vadd.f32 %v428, %v672
    %v674 = vpop.f32.mrf.mxu0
    %v675 = vpop.f32.mrf.mxu0
    %v676 = vadd.f32 %v428, %v675
    %v677 = vpop.f32.mrf.mxu0
    %678 = vmatprep.mubr.bf16.mxu0 %v273
    %679 = vmatmul.mubr.bf16.gmra.mxu0 %v233
    %v680 = vpop.f32.mrf.mxu0
    %v681 = vadd.f32 %v428, %v680
    %v682 = vpop.f32.mrf.mxu0
    %v683 = vpop.f32.mrf.mxu0
    %v684 = vadd.f32 %v428, %v683
    %v685 = vpop.f32.mrf.mxu0
    %686 = vmatprep.mubr.bf16.mxu0 %v281
    %687 = vmatmul.mubr.bf16.gmra.mxu0 %v234
    %v688 = vpop.f32.mrf.mxu0
    %v689 = vadd.f32 %v428, %v688
    %v690 = vpop.f32.mrf.mxu0
    %v691 = vpop.f32.mrf.mxu0
    %v692 = vadd.f32 %v428, %v691
    %v693 = vpop.f32.mrf.mxu0
    %694 = vmatprep.mubr.bf16.mxu0 %v289
    %695 = vmatmul.mubr.bf16.gmra.mxu0 %v235
    %v696 = vpop.f32.mrf.mxu0
    %v697 = vadd.f32 %v428, %v696
    %v698 = vpop.f32.mrf.mxu0
    %v699 = vpop.f32.mrf.mxu0
    %v700 = vadd.f32 %v428, %v699
    %v701 = vpop.f32.mrf.mxu0
    %702 = vdwg.mxu0
    %703 = vmatprep.subr.bf16.mxu0 0
    %704 = vmatpush1.bf16.msra.mxu0 %v581
    %705 = vmatprep.subr.bf16.mxu0 0
    %706 = vmatpush1.bf16.msra.mxu0 %v580
    %707 = vmatprep.subr.bf16.mxu0 0
    %708 = vmatpush1.bf16.msra.mxu0 %v579
    %709 = vmatprep.subr.bf16.mxu0 0
    %710 = vmatpush1.bf16.msra.mxu0 %v578
    %711 = vmatprep.subr.bf16.mxu0 0
    %712 = vmatpush1.bf16.msra.mxu0 %v577
    %713 = vmatprep.subr.bf16.mxu0 0
    %714 = vmatpush1.bf16.msra.mxu0 %v576
    %715 = vmatprep.subr.bf16.mxu0 0
    %716 = vmatpush1.bf16.msra.mxu0 %v575
    %717 = vmatprep.subr.bf16.mxu0 0
    %718 = vmatpush1.bf16.msra.mxu0 %v574
    %719 = vmatprep.subr.bf16.mxu0 0
    %720 = vmatpush2.bf16.msra.mxu0 %v589
    %721 = vmatprep.subr.bf16.mxu0 0
    %722 = vmatpush2.bf16.msra.mxu0 %v588
    %723 = vmatprep.subr.bf16.mxu0 0
    %724 = vmatpush2.bf16.msra.mxu0 %v587
    %725 = vmatprep.subr.bf16.mxu0 0
    %726 = vmatpush2.bf16.msra.mxu0 %v586
    %727 = vmatprep.subr.bf16.mxu0 0
    %728 = vmatpush2.bf16.msra.mxu0 %v585
    %729 = vmatprep.subr.bf16.mxu0 0
    %730 = vmatpush2.bf16.msra.mxu0 %v584
    %731 = vmatprep.subr.bf16.mxu0 0
    %732 = vmatpush2.bf16.msra.mxu0 %v583
    %733 = vmatprep.subr.bf16.mxu0 0
    %734 = vmatpush2.bf16.msra.mxu0 %v582
    %735 = vmatprep.mubr.bf16.mxu0 %v342
    %736 = vmatmul.mubr.bf16.gmra.mxu0 %v303
    %v737 = vpop.f32.mrf.mxu0
    %v738 = vadd.f32 %v657, %v737
    %v739 = vpop.f32.mrf.mxu0
    %v740 = vpop.f32.mrf.mxu0
    %v741 = vadd.f32 %v660, %v740
    %v742 = vpop.f32.mrf.mxu0
    %743 = vmatprep.mubr.bf16.mxu0 %v344
    %744 = vmatmul.mubr.bf16.gmra.mxu0 %v307
    %v745 = vpop.f32.mrf.mxu0
    %v746 = vadd.f32 %v665, %v745
    %v747 = vpop.f32.mrf.mxu0
    %v748 = vpop.f32.mrf.mxu0
    %v749 = vadd.f32 %v668, %v748
    %v750 = vpop.f32.mrf.mxu0
    %751 = vmatprep.mubr.bf16.mxu0 %v346
    %752 = vmatmul.mubr.bf16.gmra.mxu0 %v311
    %v753 = vpop.f32.mrf.mxu0
    %v754 = vadd.f32 %v673, %v753
    %v755 = vpop.f32.mrf.mxu0
    %v756 = vpop.f32.mrf.mxu0
    %v757 = vadd.f32 %v676, %v756
    %v758 = vpop.f32.mrf.mxu0
    %759 = vmatprep.mubr.bf16.mxu0 %v348
    %760 = vmatmul.mubr.bf16.gmra.mxu0 %v315
    %v761 = vpop.f32.mrf.mxu0
    %v762 = vadd.f32 %v681, %v761
    %v763 = vpop.f32.mrf.mxu0
    %v764 = vpop.f32.mrf.mxu0
    %v765 = vadd.f32 %v684, %v764
    %v766 = vpop.f32.mrf.mxu0
    %767 = vmatprep.mubr.bf16.mxu0 %v350
    %768 = vmatmul.mubr.bf16.gmra.mxu0 %v319
    %v769 = vpop.f32.mrf.mxu0
    %v770 = vadd.f32 %v689, %v769
    %v771 = vpop.f32.mrf.mxu0
    %v772 = vpop.f32.mrf.mxu0
    %v773 = vadd.f32 %v692, %v772
    %v774 = vpop.f32.mrf.mxu0
    %775 = vmatprep.mubr.bf16.mxu0 %v352
    %776 = vmatmul.mubr.bf16.gmra.mxu0 %v325
    %v777 = vpop.f32.mrf.mxu0
    %v778 = vadd.f32 %v697, %v777
    %v779 = vpop.f32.mrf.mxu0
    %v780 = vpop.f32.mrf.mxu0
    %v781 = vadd.f32 %v700, %v780
    %v782 = vpop.f32.mrf.mxu0
    %783 = vdwg.mxu0
    %v784 = vmax.f32 %v738, 0.0
    %v785 = vmax.f32 %v741, 0.0
    %v786 = vmax.f32 %v746, 0.0
    %v787 = vmax.f32 %v749, 0.0
    %v788 = vmax.f32 %v754, 0.0
    %v789 = vmax.f32 %v757, 0.0
    %v790 = vmax.f32 %v762, 0.0
    %v791 = vmax.f32 %v765, 0.0
    %v792 = vmax.f32 %v770, 0.0
    %v793 = vmax.f32 %v773, 0.0
    %v794 = vmax.f32 %v778, 0.0
    %v795 = vmax.f32 %v781, 0.0
    %v796 = vpack.c.bf16 %v785, %v784
    %v797 = vpack.c.bf16 %v787, %v786
    %v798 = vpack.c.bf16 %v789, %v788
    %v799 = vpack.c.bf16 %v791, %v790
    %v800 = vpack.c.bf16 %v793, %v792
    %v801 = vpack.c.bf16 %v795, %v794
    %v803 = vshrl.u32 %v796, 16
    %v805 = vshll.u32 %v796, 16
    %v807 = vrot.slane %v805, 1
    %v808 = vor.u32 %v803, %v807
    %v810 = vshll.u32 %v797, 16
    %v812 = vrot.slane %v810, 1
    %v813 = vsel %vm237, %v808, %v812
    %v814 = vshrl.u32 %v797, 16
    %v816 = vor.u32 %v814, %v812
    %v818 = vshll.u32 %v798, 16
    %v820 = vrot.slane %v818, 1
    %v821 = vsel %vm237, %v816, %v820
    %v822 = vshrl.u32 %v798, 16
    %v824 = vor.u32 %v822, %v820
    %v826 = vshll.u32 %v799, 16
    %v828 = vrot.slane %v826, 1
    %v829 = vsel %vm237, %v824, %v828
    %v830 = vshrl.u32 %v799, 16
    %v832 = vor.u32 %v830, %v828
    %v834 = vshll.u32 %v800, 16
    %v836 = vrot.slane %v834, 1
    %v837 = vsel %vm237, %v832, %v836
    %v838 = vshrl.u32 %v800, 16
    %v840 = vor.u32 %v838, %v836
    %v842 = vshll.u32 %v801, 16
    %v844 = vrot.slane %v842, 1
    %v845 = vsel %vm237, %v840, %v844
    %v846 = vshrl.u32 %v801, 16
    %v848 = vor.u32 %v846, %v844
    %v855 = vrot.slane %v803, 3
    %v856 = vrot.slane %v805, 4
    %v857 = vor.u32 %v855, %v856
    %v858 = vrot.slane %v814, 3
    %v859 = vrot.slane %v810, 4
    %v860 = vor.u32 %v858, %v859
    %v861 = vsel %vm296, %v857, %v860
    %v862 = vrot.slane %v822, 3
    %v863 = vrot.slane %v818, 4
    %v864 = vor.u32 %v862, %v863
    %v865 = vsel %vm296, %v860, %v864
    %v866 = vrot.slane %v830, 3
    %v867 = vrot.slane %v826, 4
    %v868 = vor.u32 %v866, %v867
    %v869 = vsel %vm296, %v864, %v868
    %v870 = vrot.slane %v838, 3
    %v871 = vrot.slane %v834, 4
    %v872 = vor.u32 %v870, %v871
    %v873 = vsel %vm296, %v868, %v872
    %v874 = vrot.slane %v846, 3
    %v875 = vrot.slane %v842, 4
    %v876 = vor.u32 %v874, %v875
    %v877 = vsel %vm296, %v872, %v876
    %v890 = vrot.slane %v796, 4
    %v891 = vrot.slane %v797, 4
    %v892 = vsel %vm339, %v890, %v891
    %v893 = vrot.slane %v798, 4
    %v894 = vsel %vm339, %v891, %v893
    %v895 = vrot.slane %v799, 4
    %v896 = vsel %vm339, %v893, %v895
    %v897 = vrot.slane %v800, 4
    %v898 = vsel %vm339, %v895, %v897
    %v899 = vrot.slane %v801, 4
    %v900 = vsel %vm339, %v897, %v899
    %v907 = vld [vmem:[%s5] sm:$0xf]
    %v908 = vld [vmem:[%s5 + $0x4] sm:$0xf]
    %v909 = vld [vmem:[%s5 + $0x8] sm:$0xf]
    %v910 = vld [vmem:[%s5 + $0xc] sm:$0xf]
    %v911 = vld [vmem:[%s5 + $0x10] sm:$0xf]
    %v912 = vld [vmem:[%s5 + $0x14] sm:$0xf]
    %v913 = vld [vmem:[%s5 + $0x18] sm:$0xf]
    %v914 = vld [vmem:[%s5 + $0x1c] sm:$0xf]
    %v915 = vld [vmem:[%s5 + $0x20] sm:$0xf]
    %v916 = vld [vmem:[%s5 + $0x24] sm:$0xf]
    %v917 = vld [vmem:[%s5 + $0x28] sm:$0xf]
    %v918 = vld [vmem:[%s5 + $0x2c] sm:$0xf]
    %v919 = vld [vmem:[%s5 + $0x30] sm:$0xf]
    %v920 = vld [vmem:[%s5 + $0x34] sm:$0xf]
    %v921 = vld [vmem:[%s5 + $0x38] sm:$0xf]
    %v922 = vld [vmem:[%s5 + $0x3c] sm:$0xf]
    %v923 = vld [vmem:[%s5 + $0x40] sm:$0xf]
    %v924 = vld [vmem:[%s5 + $0x44] sm:$0xf]
    %v925 = vld [vmem:[%s5 + $0x48] sm:$0xf]
    %v926 = vld [vmem:[%s5 + $0x4c] sm:$0xf]
    %v927 = vld [vmem:[%s5 + $0x50] sm:$0xf]
    %v928 = vld [vmem:[%s5 + $0x54] sm:$0xf]
    %v929 = vld [vmem:[%s5 + $0x58] sm:$0xf]
    %v930 = vld [vmem:[%s5 + $0x5c] sm:$0xf]
    %v931 = vld [vmem:[%s5 + $0x60] sm:$0xf]
    %v932 = vld [vmem:[%s5 + $0x64] sm:$0xf]
    %v933 = vld [vmem:[%s5 + $0x68] sm:$0xf]
    %v934 = vld [vmem:[%s5 + $0x6c] sm:$0xf]
    %v935 = vld [vmem:[%s5 + $0x70] sm:$0xf]
    %v936 = vld [vmem:[%s5 + $0x74] sm:$0xf]
    %v937 = vld [vmem:[%s5 + $0x78] sm:$0xf]
    %v938 = vld [vmem:[%s5 + $0x7c] sm:$0xf]
    %v939 = vld [vmem:[%s5 + $0x80] sm:$0xf]
    %v940 = vld [vmem:[%s5 + $0x84] sm:$0xf]
    %v941 = vld [vmem:[%s5 + $0x88] sm:$0xf]
    %v942 = vld [vmem:[%s5 + $0x8c] sm:$0xf]
    %v943 = vld [vmem:[%s5 + $0x90] sm:$0xf]
    %v944 = vld [vmem:[%s5 + $0x94] sm:$0xf]
    %v945 = vld [vmem:[%s5 + $0x98] sm:$0xf]
    %v946 = vld [vmem:[%s5 + $0x9c] sm:$0xf]
    %v947 = vld [vmem:[%s5 + $0xa0] sm:$0xf]
    %v948 = vld [vmem:[%s5 + $0xa4] sm:$0xf]
    %v949 = vld [vmem:[%s5 + $0xa8] sm:$0xf]
    %v950 = vld [vmem:[%s5 + $0xac] sm:$0xf]
    %v951 = vld [vmem:[%s5 + $0xb0] sm:$0xf]
    %v952 = vld [vmem:[%s5 + $0xb4] sm:$0xf]
    %v953 = vld [vmem:[%s5 + $0xb8] sm:$0xf]
    %v954 = vld [vmem:[%s5 + $0xbc] sm:$0xf]
    %v955 = vld [vmem:[%s5 + $0xc0] sm:$0xf]
    %v956 = vld [vmem:[%s5 + $0xc4] sm:$0xf]
    %v957 = vld [vmem:[%s5 + $0xc8] sm:$0xf]
    %v958 = vld [vmem:[%s5 + $0xcc] sm:$0xf]
    %v959 = vld [vmem:[%s5 + $0xd0] sm:$0xf]
    %v960 = vld [vmem:[%s5 + $0xd4] sm:$0xf]
    %v961 = vld [vmem:[%s5 + $0xd8] sm:$0xf]
    %v962 = vld [vmem:[%s5 + $0xdc] sm:$0xf]
    %v963 = vld [vmem:[%s5 + $0xe0] sm:$0xf]
    %v964 = vld [vmem:[%s5 + $0xe4] sm:$0xf]
    %v965 = vld [vmem:[%s5 + $0xe8] sm:$0xf]
    %v966 = vld [vmem:[%s5 + $0xec] sm:$0xf]
    %v967 = vld [vmem:[%s5 + $0xf0] sm:$0xf]
    %v968 = vld [vmem:[%s5 + $0xf4] sm:$0xf]
    %v969 = vld [vmem:[%s5 + $0xf8] sm:$0xf]
    %v970 = vld [vmem:[%s5 + $0xfc] sm:$0xf]
    %v971 = vld [vmem:[%s6] sm:$0x1]
    %v973 = vlaneseq
    %v974 = vshrl.u32 %v973, 7
    %v975 = vsub.s32 0, %v974
    %v976 = vrot.slane %v971, %v975
    %v1042 = vunpack.c.l.b16 %v907
    %v1043 = vunpack.c.l.b16 %v908
    %v1044 = vunpack.c.l.b16 %v909
    %v1045 = vunpack.c.l.b16 %v910
    %v1046 = vunpack.c.l.b16 %v911
    %v1047 = vunpack.c.l.b16 %v912
    %v1048 = vunpack.c.l.b16 %v913
    %v1049 = vunpack.c.l.b16 %v914
    %v1050 = vunpack.c.l.b16 %v915
    %v1051 = vunpack.c.l.b16 %v916
    %v1052 = vunpack.c.l.b16 %v917
    %v1053 = vunpack.c.l.b16 %v918
    %v1054 = vunpack.c.l.b16 %v919
    %v1055 = vunpack.c.l.b16 %v920
    %v1056 = vunpack.c.l.b16 %v921
    %v1057 = vunpack.c.l.b16 %v922
    %v1058 = vunpack.c.l.b16 %v923
    %v1059 = vunpack.c.l.b16 %v924
    %v1060 = vunpack.c.l.b16 %v925
    %v1061 = vunpack.c.l.b16 %v926
    %v1062 = vunpack.c.l.b16 %v927
    %v1063 = vunpack.c.l.b16 %v928
    %v1064 = vunpack.c.l.b16 %v929
    %v1065 = vunpack.c.l.b16 %v930
    %v1066 = vunpack.c.l.b16 %v931
    %v1067 = vunpack.c.l.b16 %v932
    %v1068 = vunpack.c.l.b16 %v933
    %v1069 = vunpack.c.l.b16 %v934
    %v1070 = vunpack.c.l.b16 %v935
    %v1071 = vunpack.c.l.b16 %v936
    %v1072 = vunpack.c.l.b16 %v937
    %v1073 = vunpack.c.l.b16 %v938
    %v1074 = vunpack.c.l.b16 %v939
    %v1075 = vunpack.c.l.b16 %v940
    %v1076 = vunpack.c.l.b16 %v941
    %v1077 = vunpack.c.l.b16 %v942
    %v1078 = vunpack.c.l.b16 %v943
    %v1079 = vunpack.c.l.b16 %v944
    %v1080 = vunpack.c.l.b16 %v945
    %v1081 = vunpack.c.l.b16 %v946
    %v1082 = vunpack.c.l.b16 %v947
    %v1083 = vunpack.c.l.b16 %v948
    %v1084 = vunpack.c.l.b16 %v949
    %v1085 = vunpack.c.l.b16 %v950
    %v1086 = vunpack.c.l.b16 %v951
    %v1087 = vunpack.c.l.b16 %v952
    %v1088 = vunpack.c.l.b16 %v953
    %v1089 = vunpack.c.l.b16 %v954
    %v1090 = vunpack.c.l.b16 %v955
    %v1091 = vunpack.c.l.b16 %v956
    %v1092 = vunpack.c.l.b16 %v957
    %v1093 = vunpack.c.l.b16 %v958
    %v1094 = vunpack.c.l.b16 %v959
    %v1095 = vunpack.c.l.b16 %v960
    %v1096 = vunpack.c.l.b16 %v961
    %v1097 = vunpack.c.l.b16 %v962
    %v1098 = vunpack.c.l.b16 %v963
    %v1099 = vunpack.c.l.b16 %v964
    %v1100 = vunpack.c.l.b16 %v965
    %v1101 = vunpack.c.l.b16 %v966
    %v1102 = vunpack.c.l.b16 %v967
    %v1103 = vunpack.c.l.b16 %v968
    %v1104 = vunpack.c.l.b16 %v969
    %v1105 = vunpack.c.l.b16 %v970
    %v1106 = vpack.c.b16 %v1043, %v1042
    %v1107 = vpack.c.b16 %v1045, %v1044
    %v1108 = vpack.c.b16 %v1047, %v1046
    %v1109 = vpack.c.b16 %v1049, %v1048
    %v1110 = vpack.c.b16 %v1051, %v1050
    %v1111 = vpack.c.b16 %v1053, %v1052
    %v1112 = vpack.c.b16 %v1055, %v1054
    %v1113 = vpack.c.b16 %v1057, %v1056
    %v1114 = vpack.c.b16 %v1059, %v1058
    %v1115 = vpack.c.b16 %v1061, %v1060
    %v1116 = vpack.c.b16 %v1063, %v1062
    %v1117 = vpack.c.b16 %v1065, %v1064
    %v1118 = vpack.c.b16 %v1067, %v1066
    %v1119 = vpack.c.b16 %v1069, %v1068
    %v1120 = vpack.c.b16 %v1071, %v1070
    %v1121 = vpack.c.b16 %v1073, %v1072
    %v1122 = vpack.c.b16 %v1075, %v1074
    %v1123 = vpack.c.b16 %v1077, %v1076
    %v1124 = vpack.c.b16 %v1079, %v1078
    %v1125 = vpack.c.b16 %v1081, %v1080
    %v1126 = vpack.c.b16 %v1083, %v1082
    %v1127 = vpack.c.b16 %v1085, %v1084
    %v1128 = vpack.c.b16 %v1087, %v1086
    %v1129 = vpack.c.b16 %v1089, %v1088
    %v1130 = vpack.c.b16 %v1091, %v1090
    %v1131 = vpack.c.b16 %v1093, %v1092
    %v1132 = vpack.c.b16 %v1095, %v1094
    %v1133 = vpack.c.b16 %v1097, %v1096
    %v1134 = vpack.c.b16 %v1099, %v1098
    %v1135 = vpack.c.b16 %v1101, %v1100
    %v1136 = vpack.c.b16 %v1103, %v1102
    %v1137 = vpack.c.b16 %v1105, %v1104
    %1170 = vmatprep.subr.bf16.mxu0 0
    %1171 = vmatpush1.bf16.msra.mxu0 %v1113
    %1172 = vmatprep.subr.bf16.mxu0 0
    %1173 = vmatpush1.bf16.msra.mxu0 %v1112
    %1174 = vmatprep.subr.bf16.mxu0 0
    %1175 = vmatpush1.bf16.msra.mxu0 %v1111
    %1176 = vmatprep.subr.bf16.mxu0 0
    %1177 = vmatpush1.bf16.msra.mxu0 %v1110
    %1178 = vmatprep.subr.bf16.mxu0 0
    %1179 = vmatpush1.bf16.msra.mxu0 %v1109
    %1180 = vmatprep.subr.bf16.mxu0 0
    %1181 = vmatpush1.bf16.msra.mxu0 %v1108
    %1182 = vmatprep.subr.bf16.mxu0 0
    %1183 = vmatpush1.bf16.msra.mxu0 %v1107
    %1184 = vmatprep.subr.bf16.mxu0 0
    %1185 = vmatpush1.bf16.msra.mxu0 %v1106
    %1186 = vmatprep.subr.bf16.mxu0 0
    %1187 = vmatpush2.bf16.msra.mxu0 %v1121
    %1188 = vmatprep.subr.bf16.mxu0 0
    %1189 = vmatpush2.bf16.msra.mxu0 %v1120
    %1190 = vmatprep.subr.bf16.mxu0 0
    %1191 = vmatpush2.bf16.msra.mxu0 %v1119
    %1192 = vmatprep.subr.bf16.mxu0 0
    %1193 = vmatpush2.bf16.msra.mxu0 %v1118
    %1194 = vmatprep.subr.bf16.mxu0 0
    %1195 = vmatpush2.bf16.msra.mxu0 %v1117
    %1196 = vmatprep.subr.bf16.mxu0 0
    %1197 = vmatpush2.bf16.msra.mxu0 %v1116
    %1198 = vmatprep.subr.bf16.mxu0 0
    %1199 = vmatpush2.bf16.msra.mxu0 %v1115
    %1200 = vmatprep.subr.bf16.mxu0 0
    %1201 = vmatpush2.bf16.msra.mxu0 %v1114
    %1202 = vmatprep.mubr.bf16.mxu0 %v813
    %1203 = vmatmul.mubr.bf16.gmra.mxu0 %v796
    %v1204 = vpop.f32.mrf.mxu0
    %v1205 = vadd.f32 %v976, %v1204
    %v1206 = vpop.f32.mrf.mxu0
    %v1207 = vpop.f32.mrf.mxu0
    %v1208 = vadd.f32 %v976, %v1207
    %v1209 = vpop.f32.mrf.mxu0
    %1210 = vmatprep.mubr.bf16.mxu0 %v821
    %1211 = vmatmul.mubr.bf16.gmra.mxu0 %v797
    %v1212 = vpop.f32.mrf.mxu0
    %v1213 = vadd.f32 %v976, %v1212
    %v1214 = vpop.f32.mrf.mxu0
    %v1215 = vpop.f32.mrf.mxu0
    %v1216 = vadd.f32 %v976, %v1215
    %v1217 = vpop.f32.mrf.mxu0
    %1218 = vmatprep.mubr.bf16.mxu0 %v829
    %1219 = vmatmul.mubr.bf16.gmra.mxu0 %v798
    %v1220 = vpop.f32.mrf.mxu0
    %v1221 = vadd.f32 %v976, %v1220
    %v1222 = vpop.f32.mrf.mxu0
    %v1223 = vpop.f32.mrf.mxu0
    %v1224 = vadd.f32 %v976, %v1223
    %v1225 = vpop.f32.mrf.mxu0
    %1226 = vmatprep.mubr.bf16.mxu0 %v837
    %1227 = vmatmul.mubr.bf16.gmra.mxu0 %v799
    %v1228 = vpop.f32.mrf.mxu0
    %v1229 = vadd.f32 %v976, %v1228
    %v1230 = vpop.f32.mrf.mxu0
    %v1231 = vpop.f32.mrf.mxu0
    %v1232 = vadd.f32 %v976, %v1231
    %v1233 = vpop.f32.mrf.mxu0
    %1234 = vmatprep.mubr.bf16.mxu0 %v845
    %1235 = vmatmul.mubr.bf16.gmra.mxu0 %v800
    %v1236 = vpop.f32.mrf.mxu0
    %v1237 = vadd.f32 %v976, %v1236
    %v1238 = vpop.f32.mrf.mxu0
    %v1239 = vpop.f32.mrf.mxu0
    %v1240 = vadd.f32 %v976, %v1239
    %v1241 = vpop.f32.mrf.mxu0
    %1242 = vmatprep.mubr.bf16.mxu0 %v848
    %1243 = vmatmul.mubr.bf16.gmra.mxu0 %v801
    %v1244 = vpop.f32.mrf.mxu0
    %v1245 = vadd.f32 %v976, %v1244
    %v1246 = vpop.f32.mrf.mxu0
    %v1247 = vpop.f32.mrf.mxu0
    %v1248 = vpop.f32.mrf.mxu0
    %1249 = vdwg.mxu0
    %1250 = vmatprep.subr.bf16.mxu0 0
    %1251 = vmatpush1.bf16.msra.mxu0 %v1129
    %1252 = vmatprep.subr.bf16.mxu0 0
    %1253 = vmatpush1.bf16.msra.mxu0 %v1128
    %1254 = vmatprep.subr.bf16.mxu0 0
    %1255 = vmatpush1.bf16.msra.mxu0 %v1127
    %1256 = vmatprep.subr.bf16.mxu0 0
    %1257 = vmatpush1.bf16.msra.mxu0 %v1126
    %1258 = vmatprep.subr.bf16.mxu0 0
    %1259 = vmatpush1.bf16.msra.mxu0 %v1125
    %1260 = vmatprep.subr.bf16.mxu0 0
    %1261 = vmatpush1.bf16.msra.mxu0 %v1124
    %1262 = vmatprep.subr.bf16.mxu0 0
    %1263 = vmatpush1.bf16.msra.mxu0 %v1123
    %1264 = vmatprep.subr.bf16.mxu0 0
    %1265 = vmatpush1.bf16.msra.mxu0 %v1122
    %1266 = vmatprep.subr.bf16.mxu0 0
    %1267 = vmatpush2.bf16.msra.mxu0 %v1137
    %1268 = vmatprep.subr.bf16.mxu0 0
    %1269 = vmatpush2.bf16.msra.mxu0 %v1136
    %1270 = vmatprep.subr.bf16.mxu0 0
    %1271 = vmatpush2.bf16.msra.mxu0 %v1135
    %1272 = vmatprep.subr.bf16.mxu0 0
    %1273 = vmatpush2.bf16.msra.mxu0 %v1134
    %1274 = vmatprep.subr.bf16.mxu0 0
    %1275 = vmatpush2.bf16.msra.mxu0 %v1133
    %1276 = vmatprep.subr.bf16.mxu0 0
    %1277 = vmatpush2.bf16.msra.mxu0 %v1132
    %1278 = vmatprep.subr.bf16.mxu0 0
    %1279 = vmatpush2.bf16.msra.mxu0 %v1131
    %1280 = vmatprep.subr.bf16.mxu0 0
    %1281 = vmatpush2.bf16.msra.mxu0 %v1130
    %1282 = vmatprep.mubr.bf16.mxu0 %v892
    %1283 = vmatmul.mubr.bf16.gmra.mxu0 %v861
    %v1284 = vpop.f32.mrf.mxu0
    %v1285 = vadd.f32 %v1205, %v1284
    %v1286 = vpop.f32.mrf.mxu0
    %v1287 = vpop.f32.mrf.mxu0
    %v1288 = vadd.f32 %v1208, %v1287
    %v1289 = vpop.f32.mrf.mxu0
    %1290 = vmatprep.mubr.bf16.mxu0 %v894
    %1291 = vmatmul.mubr.bf16.gmra.mxu0 %v865
    %v1292 = vpop.f32.mrf.mxu0
    %v1293 = vadd.f32 %v1213, %v1292
    %v1294 = vpop.f32.mrf.mxu0
    %v1295 = vpop.f32.mrf.mxu0
    %v1296 = vadd.f32 %v1216, %v1295
    %v1297 = vpop.f32.mrf.mxu0
    %1298 = vmatprep.mubr.bf16.mxu0 %v896
    %1299 = vmatmul.mubr.bf16.gmra.mxu0 %v869
    %v1300 = vpop.f32.mrf.mxu0
    %v1301 = vadd.f32 %v1221, %v1300
    %v1302 = vpop.f32.mrf.mxu0
    %v1303 = vpop.f32.mrf.mxu0
    %v1304 = vadd.f32 %v1224, %v1303
    %v1305 = vpop.f32.mrf.mxu0
    %1306 = vmatprep.mubr.bf16.mxu0 %v898
    %1307 = vmatmul.mubr.bf16.gmra.mxu0 %v873
    %v1308 = vpop.f32.mrf.mxu0
    %v1309 = vadd.f32 %v1229, %v1308
    %v1310 = vpop.f32.mrf.mxu0
    %v1311 = vpop.f32.mrf.mxu0
    %v1312 = vadd.f32 %v1232, %v1311
    %v1313 = vpop.f32.mrf.mxu0
    %1314 = vmatprep.mubr.bf16.mxu0 %v900
    %1315 = vmatmul.mubr.bf16.gmra.mxu0 %v877
    %v1316 = vpop.f32.mrf.mxu0
    %v1317 = vadd.f32 %v1237, %v1316
    %v1318 = vpop.f32.mrf.mxu0
    %v1319 = vpop.f32.mrf.mxu0
    %v1320 = vadd.f32 %v1240, %v1319
    %v1321 = vpop.f32.mrf.mxu0
    %1322 = vmatprep.mubr.bf16.mxu0 %v899
    %1323 = vmatmul.mubr.bf16.gmra.mxu0 %v876
    %v1324 = vpop.f32.mrf.mxu0
    %v1325 = vadd.f32 %v1245, %v1324
    %v1326 = vpop.f32.mrf.mxu0
    %v1327 = vpop.f32.mrf.mxu0
    %v1328 = vpop.f32.mrf.mxu0
    %1329 = vdwg.mxu0
    %v1330 = vmax.f32 %v1285, 0.0
    %v1331 = vmax.f32 %v1288, 0.0
    %v1332 = vmax.f32 %v1293, 0.0
    %v1333 = vmax.f32 %v1296, 0.0
    %v1334 = vmax.f32 %v1301, 0.0
    %v1335 = vmax.f32 %v1304, 0.0
    %v1336 = vmax.f32 %v1309, 0.0
    %v1337 = vmax.f32 %v1312, 0.0
    %v1338 = vmax.f32 %v1317, 0.0
    %v1339 = vmax.f32 %v1320, 0.0
    %v1340 = vmax.f32 %v1325, 0.0
    %v1341 = vpack.c.bf16 %v1331, %v1330
    %v1342 = vpack.c.bf16 %v1333, %v1332
    %v1343 = vpack.c.bf16 %v1335, %v1334
    %v1344 = vpack.c.bf16 %v1337, %v1336
    %v1345 = vpack.c.bf16 %v1339, %v1338
    %v1346 = vpack.c.bf16 %v1340, %v1340
    %v1348 = vshrl.u32 %v1341, 16
    %v1350 = vshll.u32 %v1341, 16
    %v1352 = vrot.slane %v1350, 1
    %v1353 = vor.u32 %v1348, %v1352
    %v1355 = vshll.u32 %v1342, 16
    %v1357 = vrot.slane %v1355, 1
    %v1358 = vsel %vm237, %v1353, %v1357
    %v1359 = vshrl.u32 %v1342, 16
    %v1361 = vor.u32 %v1359, %v1357
    %v1363 = vshll.u32 %v1343, 16
    %v1365 = vrot.slane %v1363, 1
    %v1366 = vsel %vm237, %v1361, %v1365
    %v1367 = vshrl.u32 %v1343, 16
    %v1369 = vor.u32 %v1367, %v1365
    %v1371 = vshll.u32 %v1344, 16
    %v1373 = vrot.slane %v1371, 1
    %v1374 = vsel %vm237, %v1369, %v1373
    %v1375 = vshrl.u32 %v1344, 16
    %v1377 = vor.u32 %v1375, %v1373
    %v1379 = vshll.u32 %v1345, 16
    %v1381 = vrot.slane %v1379, 1
    %v1382 = vsel %vm237, %v1377, %v1381
    %v1383 = vshrl.u32 %v1345, 16
    %v1385 = vor.u32 %v1383, %v1381
    %v1387 = vshll.u32 %v1346, 16
    %v1389 = vrot.slane %v1387, 1
    %v1390 = vsel %vm237, %v1385, %v1389
    %v1396 = vrot.slane %v1348, 3
    %v1397 = vrot.slane %v1350, 4
    %v1398 = vor.u32 %v1396, %v1397
    %v1399 = vrot.slane %v1359, 3
    %v1400 = vrot.slane %v1355, 4
    %v1401 = vor.u32 %v1399, %v1400
    %v1402 = vsel %vm296, %v1398, %v1401
    %v1403 = vrot.slane %v1367, 3
    %v1404 = vrot.slane %v1363, 4
    %v1405 = vor.u32 %v1403, %v1404
    %v1406 = vsel %vm296, %v1401, %v1405
    %v1407 = vrot.slane %v1375, 3
    %v1408 = vrot.slane %v1371, 4
    %v1409 = vor.u32 %v1407, %v1408
    %v1410 = vsel %vm296, %v1405, %v1409
    %v1411 = vrot.slane %v1383, 3
    %v1412 = vrot.slane %v1379, 4
    %v1413 = vor.u32 %v1411, %v1412
    %v1414 = vsel %vm296, %v1409, %v1413
    %v1415 = vshrl.u32 %v1346, 16
    %v1417 = vrot.slane %v1415, 3
    %v1418 = vrot.slane %v1387, 4
    %v1419 = vor.u32 %v1417, %v1418
    %v1420 = vsel %vm296, %v1413, %v1419
    %v1432 = vrot.slane %v1341, 4
    %v1433 = vrot.slane %v1342, 4
    %v1434 = vsel %vm339, %v1432, %v1433
    %v1435 = vrot.slane %v1343, 4
    %v1436 = vsel %vm339, %v1433, %v1435
    %v1437 = vrot.slane %v1344, 4
    %v1438 = vsel %vm339, %v1435, %v1437
    %v1439 = vrot.slane %v1345, 4
    %v1440 = vsel %vm339, %v1437, %v1439
    %v1441 = vrot.slane %v1346, 4
    %v1442 = vsel %vm339, %v1439, %v1441
    %v1448 = vld [vmem:[%s7] sm:$0xf]
    %v1449 = vld [vmem:[%s7 + $0x4] sm:$0xf]
    %v1450 = vld [vmem:[%s7 + $0x8] sm:$0xf]
    %v1451 = vld [vmem:[%s7 + $0xc] sm:$0xf]
    %v1452 = vld [vmem:[%s7 + $0x10] sm:$0xf]
    %v1453 = vld [vmem:[%s7 + $0x14] sm:$0xf]
    %v1454 = vld [vmem:[%s7 + $0x18] sm:$0xf]
    %v1455 = vld [vmem:[%s7 + $0x1c] sm:$0xf]
    %v1456 = vld [vmem:[%s7 + $0x20] sm:$0xf]
    %v1457 = vld [vmem:[%s7 + $0x24] sm:$0xf]
    %v1458 = vld [vmem:[%s7 + $0x28] sm:$0xf]
    %v1459 = vld [vmem:[%s7 + $0x2c] sm:$0xf]
    %v1460 = vld [vmem:[%s7 + $0x30] sm:$0xf]
    %v1461 = vld [vmem:[%s7 + $0x34] sm:$0xf]
    %v1462 = vld [vmem:[%s7 + $0x38] sm:$0xf]
    %v1463 = vld [vmem:[%s7 + $0x3c] sm:$0xf]
    %v1464 = vld [vmem:[%s7 + $0x40] sm:$0xf]
    %v1465 = vld [vmem:[%s7 + $0x44] sm:$0xf]
    %v1466 = vld [vmem:[%s7 + $0x48] sm:$0xf]
    %v1467 = vld [vmem:[%s7 + $0x4c] sm:$0xf]
    %v1468 = vld [vmem:[%s7 + $0x50] sm:$0xf]
    %v1469 = vld [vmem:[%s7 + $0x54] sm:$0xf]
    %v1470 = vld [vmem:[%s7 + $0x58] sm:$0xf]
    %v1471 = vld [vmem:[%s7 + $0x5c] sm:$0xf]
    %v1472 = vld [vmem:[%s7 + $0x60] sm:$0xf]
    %v1473 = vld [vmem:[%s7 + $0x64] sm:$0xf]
    %v1474 = vld [vmem:[%s7 + $0x68] sm:$0xf]
    %v1475 = vld [vmem:[%s7 + $0x6c] sm:$0xf]
    %v1476 = vld [vmem:[%s7 + $0x70] sm:$0xf]
    %v1477 = vld [vmem:[%s7 + $0x74] sm:$0xf]
    %v1478 = vld [vmem:[%s7 + $0x78] sm:$0xf]
    %v1479 = vld [vmem:[%s7 + $0x7c] sm:$0xf]
    %v1480 = vld [vmem:[%s7 + $0x80] sm:$0xf]
    %v1481 = vld [vmem:[%s7 + $0x84] sm:$0xf]
    %v1482 = vld [vmem:[%s7 + $0x88] sm:$0xf]
    %v1483 = vld [vmem:[%s7 + $0x8c] sm:$0xf]
    %v1484 = vld [vmem:[%s7 + $0x90] sm:$0xf]
    %v1485 = vld [vmem:[%s7 + $0x94] sm:$0xf]
    %v1486 = vld [vmem:[%s7 + $0x98] sm:$0xf]
    %v1487 = vld [vmem:[%s7 + $0x9c] sm:$0xf]
    %v1488 = vld [vmem:[%s7 + $0xa0] sm:$0xf]
    %v1489 = vld [vmem:[%s7 + $0xa4] sm:$0xf]
    %v1490 = vld [vmem:[%s7 + $0xa8] sm:$0xf]
    %v1491 = vld [vmem:[%s7 + $0xac] sm:$0xf]
    %v1492 = vld [vmem:[%s7 + $0xb0] sm:$0xf]
    %v1493 = vld [vmem:[%s7 + $0xb4] sm:$0xf]
    %v1494 = vld [vmem:[%s7 + $0xb8] sm:$0xf]
    %v1495 = vld [vmem:[%s7 + $0xbc] sm:$0xf]
    %v1496 = vld [vmem:[%s7 + $0xc0] sm:$0xf]
    %v1497 = vld [vmem:[%s7 + $0xc4] sm:$0xf]
    %v1498 = vld [vmem:[%s7 + $0xc8] sm:$0xf]
    %v1499 = vld [vmem:[%s7 + $0xcc] sm:$0xf]
    %v1500 = vld [vmem:[%s7 + $0xd0] sm:$0xf]
    %v1501 = vld [vmem:[%s7 + $0xd4] sm:$0xf]
    %v1502 = vld [vmem:[%s7 + $0xd8] sm:$0xf]
    %v1503 = vld [vmem:[%s7 + $0xdc] sm:$0xf]
    %v1504 = vld [vmem:[%s7 + $0xe0] sm:$0xf]
    %v1505 = vld [vmem:[%s7 + $0xe4] sm:$0xf]
    %v1506 = vld [vmem:[%s7 + $0xe8] sm:$0xf]
    %v1507 = vld [vmem:[%s7 + $0xec] sm:$0xf]
    %v1508 = vld [vmem:[%s7 + $0xf0] sm:$0xf]
    %v1509 = vld [vmem:[%s7 + $0xf4] sm:$0xf]
    %v1510 = vld [vmem:[%s7 + $0xf8] sm:$0xf]
    %v1511 = vld [vmem:[%s7 + $0xfc] sm:$0xf]
    %v1512 = vld [vmem:[%s8] sm:$0x1]
    %v1514 = vlaneseq
    %v1515 = vshrl.u32 %v1514, 7
    %v1516 = vsub.s32 0, %v1515
    %v1517 = vrot.slane %v1512, %v1516
    %v1583 = vunpack.c.l.b16 %v1448
    %v1584 = vunpack.c.l.b16 %v1449
    %v1585 = vunpack.c.l.b16 %v1450
    %v1586 = vunpack.c.l.b16 %v1451
    %v1587 = vunpack.c.l.b16 %v1452
    %v1588 = vunpack.c.l.b16 %v1453
    %v1589 = vunpack.c.l.b16 %v1454
    %v1590 = vunpack.c.l.b16 %v1455
    %v1591 = vunpack.c.l.b16 %v1456
    %v1592 = vunpack.c.l.b16 %v1457
    %v1593 = vunpack.c.l.b16 %v1458
    %v1594 = vunpack.c.l.b16 %v1459
    %v1595 = vunpack.c.l.b16 %v1460
    %v1596 = vunpack.c.l.b16 %v1461
    %v1597 = vunpack.c.l.b16 %v1462
    %v1598 = vunpack.c.l.b16 %v1463
    %v1599 = vunpack.c.l.b16 %v1464
    %v1600 = vunpack.c.l.b16 %v1465
    %v1601 = vunpack.c.l.b16 %v1466
    %v1602 = vunpack.c.l.b16 %v1467
    %v1603 = vunpack.c.l.b16 %v1468
    %v1604 = vunpack.c.l.b16 %v1469
    %v1605 = vunpack.c.l.b16 %v1470
    %v1606 = vunpack.c.l.b16 %v1471
    %v1607 = vunpack.c.l.b16 %v1472
    %v1608 = vunpack.c.l.b16 %v1473
    %v1609 = vunpack.c.l.b16 %v1474
    %v1610 = vunpack.c.l.b16 %v1475
    %v1611 = vunpack.c.l.b16 %v1476
    %v1612 = vunpack.c.l.b16 %v1477
    %v1613 = vunpack.c.l.b16 %v1478
    %v1614 = vunpack.c.l.b16 %v1479
    %v1615 = vunpack.c.l.b16 %v1480
    %v1616 = vunpack.c.l.b16 %v1481
    %v1617 = vunpack.c.l.b16 %v1482
    %v1618 = vunpack.c.l.b16 %v1483
    %v1619 = vunpack.c.l.b16 %v1484
    %v1620 = vunpack.c.l.b16 %v1485
    %v1621 = vunpack.c.l.b16 %v1486
    %v1622 = vunpack.c.l.b16 %v1487
    %v1623 = vunpack.c.l.b16 %v1488
    %v1624 = vunpack.c.l.b16 %v1489
    %v1625 = vunpack.c.l.b16 %v1490
    %v1626 = vunpack.c.l.b16 %v1491
    %v1627 = vunpack.c.l.b16 %v1492
    %v1628 = vunpack.c.l.b16 %v1493
    %v1629 = vunpack.c.l.b16 %v1494
    %v1630 = vunpack.c.l.b16 %v1495
    %v1631 = vunpack.c.l.b16 %v1496
    %v1632 = vunpack.c.l.b16 %v1497
    %v1633 = vunpack.c.l.b16 %v1498
    %v1634 = vunpack.c.l.b16 %v1499
    %v1635 = vunpack.c.l.b16 %v1500
    %v1636 = vunpack.c.l.b16 %v1501
    %v1637 = vunpack.c.l.b16 %v1502
    %v1638 = vunpack.c.l.b16 %v1503
    %v1639 = vunpack.c.l.b16 %v1504
    %v1640 = vunpack.c.l.b16 %v1505
    %v1641 = vunpack.c.l.b16 %v1506
    %v1642 = vunpack.c.l.b16 %v1507
    %v1643 = vunpack.c.l.b16 %v1508
    %v1644 = vunpack.c.l.b16 %v1509
    %v1645 = vunpack.c.l.b16 %v1510
    %v1646 = vunpack.c.l.b16 %v1511
    %v1647 = vpack.c.b16 %v1584, %v1583
    %v1648 = vpack.c.b16 %v1586, %v1585
    %v1649 = vpack.c.b16 %v1588, %v1587
    %v1650 = vpack.c.b16 %v1590, %v1589
    %v1651 = vpack.c.b16 %v1592, %v1591
    %v1652 = vpack.c.b16 %v1594, %v1593
    %v1653 = vpack.c.b16 %v1596, %v1595
    %v1654 = vpack.c.b16 %v1598, %v1597
    %v1655 = vpack.c.b16 %v1600, %v1599
    %v1656 = vpack.c.b16 %v1602, %v1601
    %v1657 = vpack.c.b16 %v1604, %v1603
    %v1658 = vpack.c.b16 %v1606, %v1605
    %v1659 = vpack.c.b16 %v1608, %v1607
    %v1660 = vpack.c.b16 %v1610, %v1609
    %v1661 = vpack.c.b16 %v1612, %v1611
    %v1662 = vpack.c.b16 %v1614, %v1613
    %v1663 = vpack.c.b16 %v1616, %v1615
    %v1664 = vpack.c.b16 %v1618, %v1617
    %v1665 = vpack.c.b16 %v1620, %v1619
    %v1666 = vpack.c.b16 %v1622, %v1621
    %v1667 = vpack.c.b16 %v1624, %v1623
    %v1668 = vpack.c.b16 %v1626, %v1625
    %v1669 = vpack.c.b16 %v1628, %v1627
    %v1670 = vpack.c.b16 %v1630, %v1629
    %v1671 = vpack.c.b16 %v1632, %v1631
    %v1672 = vpack.c.b16 %v1634, %v1633
    %v1673 = vpack.c.b16 %v1636, %v1635
    %v1674 = vpack.c.b16 %v1638, %v1637
    %v1675 = vpack.c.b16 %v1640, %v1639
    %v1676 = vpack.c.b16 %v1642, %v1641
    %v1677 = vpack.c.b16 %v1644, %v1643
    %v1678 = vpack.c.b16 %v1646, %v1645
    %1711 = vmatprep.subr.bf16.mxu0 0
    %1712 = vmatpush1.bf16.msra.mxu0 %v1654
    %1713 = vmatprep.subr.bf16.mxu0 0
    %1714 = vmatpush1.bf16.msra.mxu0 %v1653
    %1715 = vmatprep.subr.bf16.mxu0 0
    %1716 = vmatpush1.bf16.msra.mxu0 %v1652
    %1717 = vmatprep.subr.bf16.mxu0 0
    %1718 = vmatpush1.bf16.msra.mxu0 %v1651
    %1719 = vmatprep.subr.bf16.mxu0 0
    %1720 = vmatpush1.bf16.msra.mxu0 %v1650
    %1721 = vmatprep.subr.bf16.mxu0 0
    %1722 = vmatpush1.bf16.msra.mxu0 %v1649
    %1723 = vmatprep.subr.bf16.mxu0 0
    %1724 = vmatpush1.bf16.msra.mxu0 %v1648
    %1725 = vmatprep.subr.bf16.mxu0 0
    %1726 = vmatpush1.bf16.msra.mxu0 %v1647
    %1727 = vmatprep.subr.bf16.mxu0 0
    %1728 = vmatpush2.bf16.msra.mxu0 %v1662
    %1729 = vmatprep.subr.bf16.mxu0 0
    %1730 = vmatpush2.bf16.msra.mxu0 %v1661
    %1731 = vmatprep.subr.bf16.mxu0 0
    %1732 = vmatpush2.bf16.msra.mxu0 %v1660
    %1733 = vmatprep.subr.bf16.mxu0 0
    %1734 = vmatpush2.bf16.msra.mxu0 %v1659
    %1735 = vmatprep.subr.bf16.mxu0 0
    %1736 = vmatpush2.bf16.msra.mxu0 %v1658
    %1737 = vmatprep.subr.bf16.mxu0 0
    %1738 = vmatpush2.bf16.msra.mxu0 %v1657
    %1739 = vmatprep.subr.bf16.mxu0 0
    %1740 = vmatpush2.bf16.msra.mxu0 %v1656
    %1741 = vmatprep.subr.bf16.mxu0 0
    %1742 = vmatpush2.bf16.msra.mxu0 %v1655
    %1743 = vmatprep.mubr.bf16.mxu0 %v1358
    %1744 = vmatmul.mubr.bf16.gmra.mxu0 %v1341
    %v1745 = vpop.f32.mrf.mxu0
    %v1746 = vadd.f32 %v1517, %v1745
    %v1747 = vpop.f32.mrf.mxu0
    %v1748 = vpop.f32.mrf.mxu0
    %v1749 = vadd.f32 %v1517, %v1748
    %v1750 = vpop.f32.mrf.mxu0
    %1751 = vmatprep.mubr.bf16.mxu0 %v1366
    %1752 = vmatmul.mubr.bf16.gmra.mxu0 %v1342
    %v1753 = vpop.f32.mrf.mxu0
    %v1754 = vadd.f32 %v1517, %v1753
    %v1755 = vpop.f32.mrf.mxu0
    %v1756 = vpop.f32.mrf.mxu0
    %v1757 = vadd.f32 %v1517, %v1756
    %v1758 = vpop.f32.mrf.mxu0
    %1759 = vmatprep.mubr.bf16.mxu0 %v1374
    %1760 = vmatmul.mubr.bf16.gmra.mxu0 %v1343
    %v1761 = vpop.f32.mrf.mxu0
    %v1762 = vadd.f32 %v1517, %v1761
    %v1763 = vpop.f32.mrf.mxu0
    %v1764 = vpop.f32.mrf.mxu0
    %v1765 = vadd.f32 %v1517, %v1764
    %v1766 = vpop.f32.mrf.mxu0
    %1767 = vmatprep.mubr.bf16.mxu0 %v1382
    %1768 = vmatmul.mubr.bf16.gmra.mxu0 %v1344
    %v1769 = vpop.f32.mrf.mxu0
    %v1770 = vadd.f32 %v1517, %v1769
    %v1771 = vpop.f32.mrf.mxu0
    %v1772 = vpop.f32.mrf.mxu0
    %v1773 = vadd.f32 %v1517, %v1772
    %v1774 = vpop.f32.mrf.mxu0
    %1775 = vmatprep.mubr.bf16.mxu0 %v1390
    %1776 = vmatmul.mubr.bf16.gmra.mxu0 %v1345
    %v1777 = vpop.f32.mrf.mxu0
    %v1778 = vadd.f32 %v1517, %v1777
    %v1779 = vpop.f32.mrf.mxu0
    %v1780 = vpop.f32.mrf.mxu0
    %v1781 = vadd.f32 %v1517, %v1780
    %v1782 = vpop.f32.mrf.mxu0
    %1783 = vdwg.mxu0
    %1784 = vmatprep.subr.bf16.mxu0 0
    %1785 = vmatpush1.bf16.msra.mxu0 %v1670
    %1786 = vmatprep.subr.bf16.mxu0 0
    %1787 = vmatpush1.bf16.msra.mxu0 %v1669
    %1788 = vmatprep.subr.bf16.mxu0 0
    %1789 = vmatpush1.bf16.msra.mxu0 %v1668
    %1790 = vmatprep.subr.bf16.mxu0 0
    %1791 = vmatpush1.bf16.msra.mxu0 %v1667
    %1792 = vmatprep.subr.bf16.mxu0 0
    %1793 = vmatpush1.bf16.msra.mxu0 %v1666
    %1794 = vmatprep.subr.bf16.mxu0 0
    %1795 = vmatpush1.bf16.msra.mxu0 %v1665
    %1796 = vmatprep.subr.bf16.mxu0 0
    %1797 = vmatpush1.bf16.msra.mxu0 %v1664
    %1798 = vmatprep.subr.bf16.mxu0 0
    %1799 = vmatpush1.bf16.msra.mxu0 %v1663
    %1800 = vmatprep.subr.bf16.mxu0 0
    %1801 = vmatpush2.bf16.msra.mxu0 %v1678
    %1802 = vmatprep.subr.bf16.mxu0 0
    %1803 = vmatpush2.bf16.msra.mxu0 %v1677
    %1804 = vmatprep.subr.bf16.mxu0 0
    %1805 = vmatpush2.bf16.msra.mxu0 %v1676
    %1806 = vmatprep.subr.bf16.mxu0 0
    %1807 = vmatpush2.bf16.msra.mxu0 %v1675
    %1808 = vmatprep.subr.bf16.mxu0 0
    %1809 = vmatpush2.bf16.msra.mxu0 %v1674
    %1810 = vmatprep.subr.bf16.mxu0 0
    %1811 = vmatpush2.bf16.msra.mxu0 %v1673
    %1812 = vmatprep.subr.bf16.mxu0 0
    %1813 = vmatpush2.bf16.msra.mxu0 %v1672
    %1814 = vmatprep.subr.bf16.mxu0 0
    %1815 = vmatpush2.bf16.msra.mxu0 %v1671
    %1816 = vmatprep.mubr.bf16.mxu0 %v1434
    %1817 = vmatmul.mubr.bf16.gmra.mxu0 %v1402
    %v1818 = vpop.f32.mrf.mxu0
    %v1819 = vadd.f32 %v1746, %v1818
    %v1820 = vpop.f32.mrf.mxu0
    %v1821 = vpop.f32.mrf.mxu0
    %v1822 = vadd.f32 %v1749, %v1821
    %v1823 = vpop.f32.mrf.mxu0
    %1824 = vmatprep.mubr.bf16.mxu0 %v1436
    %1825 = vmatmul.mubr.bf16.gmra.mxu0 %v1406
    %v1826 = vpop.f32.mrf.mxu0
    %v1827 = vadd.f32 %v1754, %v1826
    %v1828 = vpop.f32.mrf.mxu0
    %v1829 = vpop.f32.mrf.mxu0
    %v1830 = vadd.f32 %v1757, %v1829
    %v1831 = vpop.f32.mrf.mxu0
    %1832 = vmatprep.mubr.bf16.mxu0 %v1438
    %1833 = vmatmul.mubr.bf16.gmra.mxu0 %v1410
    %v1834 = vpop.f32.mrf.mxu0
    %v1835 = vadd.f32 %v1762, %v1834
    %v1836 = vpop.f32.mrf.mxu0
    %v1837 = vpop.f32.mrf.mxu0
    %v1838 = vadd.f32 %v1765, %v1837
    %v1839 = vpop.f32.mrf.mxu0
    %1840 = vmatprep.mubr.bf16.mxu0 %v1440
    %1841 = vmatmul.mubr.bf16.gmra.mxu0 %v1414
    %v1842 = vpop.f32.mrf.mxu0
    %v1843 = vadd.f32 %v1770, %v1842
    %v1844 = vpop.f32.mrf.mxu0
    %v1845 = vpop.f32.mrf.mxu0
    %v1846 = vadd.f32 %v1773, %v1845
    %v1847 = vpop.f32.mrf.mxu0
    %1848 = vmatprep.mubr.bf16.mxu0 %v1442
    %1849 = vmatmul.mubr.bf16.gmra.mxu0 %v1420
    %v1850 = vpop.f32.mrf.mxu0
    %v1851 = vadd.f32 %v1778, %v1850
    %v1852 = vpop.f32.mrf.mxu0
    %v1853 = vpop.f32.mrf.mxu0
    %v1854 = vadd.f32 %v1781, %v1853
    %v1855 = vpop.f32.mrf.mxu0
    %1856 = vdwg.mxu0
    %v1857 = vmax.f32 %v1819, 0.0
    %v1858 = vmax.f32 %v1822, 0.0
    %v1859 = vmax.f32 %v1827, 0.0
    %v1860 = vmax.f32 %v1830, 0.0
    %v1861 = vmax.f32 %v1835, 0.0
    %v1862 = vmax.f32 %v1838, 0.0
    %v1863 = vmax.f32 %v1843, 0.0
    %v1864 = vmax.f32 %v1846, 0.0
    %v1865 = vmax.f32 %v1851, 0.0
    %v1866 = vmax.f32 %v1854, 0.0
    %v1867 = vpack.c.bf16 %v1858, %v1857
    %v1868 = vpack.c.bf16 %v1860, %v1859
    %v1869 = vpack.c.bf16 %v1862, %v1861
    %v1870 = vpack.c.bf16 %v1864, %v1863
    %v1871 = vpack.c.bf16 %v1866, %v1865
    %v1873 = vshrl.u32 %v1867, 16
    %v1875 = vshll.u32 %v1867, 16
    %v1877 = vrot.slane %v1875, 1
    %v1878 = vor.u32 %v1873, %v1877
    %v1880 = vshll.u32 %v1868, 16
    %v1882 = vrot.slane %v1880, 1
    %v1883 = vsel %vm237, %v1878, %v1882
    %v1884 = vshrl.u32 %v1868, 16
    %v1886 = vor.u32 %v1884, %v1882
    %v1888 = vshll.u32 %v1869, 16
    %v1890 = vrot.slane %v1888, 1
    %v1891 = vsel %vm237, %v1886, %v1890
    %v1892 = vshrl.u32 %v1869, 16
    %v1894 = vor.u32 %v1892, %v1890
    %v1896 = vshll.u32 %v1870, 16
    %v1898 = vrot.slane %v1896, 1
    %v1899 = vsel %vm237, %v1894, %v1898
    %v1900 = vshrl.u32 %v1870, 16
    %v1902 = vor.u32 %v1900, %v1898
    %v1904 = vshll.u32 %v1871, 16
    %v1906 = vrot.slane %v1904, 1
    %v1907 = vsel %vm237, %v1902, %v1906
    %vm1917 = vcmask 1046528
    %v1918 = vrot.slane %v1867, 1
    %v1919 = vrot.slane %v1868, 1
    %v1920 = vsel %vm1917, %v1918, %v1919
    %v1921 = vrot.slane %v1869, 1
    %v1922 = vsel %vm1917, %v1919, %v1921
    %v1923 = vrot.slane %v1870, 1
    %v1924 = vsel %vm1917, %v1921, %v1923
    %v1925 = vrot.slane %v1871, 1
    %v1926 = vsel %vm1917, %v1923, %v1925
    %v1931 = vrot.slane %v1873, 3
    %v1932 = vrot.slane %v1875, 4
    %v1933 = vor.u32 %v1931, %v1932
    %v1934 = vrot.slane %v1884, 3
    %v1935 = vrot.slane %v1880, 4
    %v1936 = vor.u32 %v1934, %v1935
    %v1937 = vsel %vm296, %v1933, %v1936
    %v1938 = vrot.slane %v1892, 3
    %v1939 = vrot.slane %v1888, 4
    %v1940 = vor.u32 %v1938, %v1939
    %v1941 = vsel %vm296, %v1936, %v1940
    %v1942 = vrot.slane %v1900, 3
    %v1943 = vrot.slane %v1896, 4
    %v1944 = vor.u32 %v1942, %v1943
    %v1945 = vsel %vm296, %v1940, %v1944
    %v1946 = vshrl.u32 %v1871, 16
    %v1948 = vrot.slane %v1946, 3
    %v1949 = vrot.slane %v1904, 4
    %v1950 = vor.u32 %v1948, %v1949
    %v1951 = vsel %vm296, %v1944, %v1950
    %v1956 = vrot.slane %v1867, 4
    %v1957 = vrot.slane %v1868, 4
    %v1958 = vsel %vm339, %v1956, %v1957
    %v1959 = vrot.slane %v1869, 4
    %v1960 = vsel %vm339, %v1957, %v1959
    %v1961 = vrot.slane %v1870, 4
    %v1962 = vsel %vm339, %v1959, %v1961
    %v1963 = vrot.slane %v1871, 4
    %v1964 = vsel %vm339, %v1961, %v1963
    %vm1969 = vsmask.f32 3328
    %v1970 = vrot.slane %v1873, 4
    %v1971 = vrot.slane %v1875, 5
    %v1972 = vor.u32 %v1970, %v1971
    %v1973 = vrot.slane %v1884, 4
    %v1974 = vrot.slane %v1880, 5
    %v1975 = vor.u32 %v1973, %v1974
    %v1976 = vsel %vm1969, %v1972, %v1975
    %v1977 = vrot.slane %v1892, 4
    %v1978 = vrot.slane %v1888, 5
    %v1979 = vor.u32 %v1977, %v1978
    %v1980 = vsel %vm1969, %v1975, %v1979
    %v1981 = vrot.slane %v1900, 4
    %v1982 = vrot.slane %v1896, 5
    %v1983 = vor.u32 %v1981, %v1982
    %v1984 = vsel %vm1969, %v1979, %v1983
    %v1985 = vrot.slane %v1946, 4
    %v1986 = vrot.slane %v1904, 5
    %v1987 = vor.u32 %v1985, %v1986
    %v1988 = vsel %vm1969, %v1983, %v1987
    %vm1993 = vcmask 1040384
    %v1994 = vrot.slane %v1867, 7
    %v1995 = vrot.slane %v1868, 7
    %v1996 = vsel %vm1993, %v1994, %v1995
    %v1997 = vrot.slane %v1869, 7
    %v1998 = vsel %vm1993, %v1995, %v1997
    %v1999 = vrot.slane %v1870, 7
    %v2000 = vsel %vm1993, %v1997, %v1999
    %v2001 = vrot.slane %v1871, 7
    %v2002 = vsel %vm1993, %v1999, %v2001
    %vm2007 = vsmask.f32 256
    %v2008 = vrot.slane %v1873, 7
    %v2009 = vrot.slane %v1884, 7
    %v2010 = vor.u32 %v2009, %v1880
    %v2011 = vsel %vm2007, %v2008, %v2010
    %v2012 = vrot.slane %v1892, 7
    %v2013 = vor.u32 %v2012, %v1888
    %v2014 = vsel %vm2007, %v2009, %v2013
    %v2015 = vrot.slane %v1900, 7
    %v2016 = vor.u32 %v2015, %v1896
    %v2017 = vsel %vm2007, %v2012, %v2016
    %v2018 = vrot.slane %v1946, 7
    %v2019 = vor.u32 %v2018, %v1904
    %v2020 = vsel %vm2007, %v2015, %v2019
    %v2025 = vld [vmem:[%s9] sm:$0xf]
    %v2026 = vld [vmem:[%s9 + $0x4] sm:$0xf]
    %v2027 = vld [vmem:[%s9 + $0x8] sm:$0xf]
    %v2028 = vld [vmem:[%s9 + $0xc] sm:$0xf]
    %v2029 = vld [vmem:[%s9 + $0x10] sm:$0xf]
    %v2030 = vld [vmem:[%s9 + $0x14] sm:$0xf]
    %v2031 = vld [vmem:[%s9 + $0x18] sm:$0xf]
    %v2032 = vld [vmem:[%s9 + $0x1c] sm:$0xf]
    %v2033 = vld [vmem:[%s9 + $0x20] sm:$0xf]
    %v2034 = vld [vmem:[%s9 + $0x24] sm:$0xf]
    %v2035 = vld [vmem:[%s9 + $0x28] sm:$0xf]
    %v2036 = vld [vmem:[%s9 + $0x2c] sm:$0xf]
    %v2037 = vld [vmem:[%s9 + $0x30] sm:$0xf]
    %v2038 = vld [vmem:[%s9 + $0x34] sm:$0xf]
    %v2039 = vld [vmem:[%s9 + $0x38] sm:$0xf]
    %v2040 = vld [vmem:[%s9 + $0x3c] sm:$0xf]
    %v2041 = vld [vmem:[%s9 + $0x40] sm:$0xf]
    %v2042 = vld [vmem:[%s9 + $0x44] sm:$0xf]
    %v2043 = vld [vmem:[%s9 + $0x48] sm:$0xf]
    %v2044 = vld [vmem:[%s9 + $0x4c] sm:$0xf]
    %v2045 = vld [vmem:[%s9 + $0x50] sm:$0xf]
    %v2046 = vld [vmem:[%s9 + $0x54] sm:$0xf]
    %v2047 = vld [vmem:[%s9 + $0x58] sm:$0xf]
    %v2048 = vld [vmem:[%s9 + $0x5c] sm:$0xf]
    %v2049 = vld [vmem:[%s9 + $0x60] sm:$0xf]
    %v2050 = vld [vmem:[%s9 + $0x64] sm:$0xf]
    %v2051 = vld [vmem:[%s9 + $0x68] sm:$0xf]
    %v2052 = vld [vmem:[%s9 + $0x6c] sm:$0xf]
    %v2053 = vld [vmem:[%s9 + $0x70] sm:$0xf]
    %v2054 = vld [vmem:[%s9 + $0x74] sm:$0xf]
    %v2055 = vld [vmem:[%s9 + $0x78] sm:$0xf]
    %v2056 = vld [vmem:[%s9 + $0x7c] sm:$0xf]
    %v2057 = vld [vmem:[%s9 + $0x80] sm:$0xf]
    %v2058 = vld [vmem:[%s9 + $0x84] sm:$0xf]
    %v2059 = vld [vmem:[%s9 + $0x88] sm:$0xf]
    %v2060 = vld [vmem:[%s9 + $0x8c] sm:$0xf]
    %v2061 = vld [vmem:[%s9 + $0x90] sm:$0xf]
    %v2062 = vld [vmem:[%s9 + $0x94] sm:$0xf]
    %v2063 = vld [vmem:[%s9 + $0x98] sm:$0xf]
    %v2064 = vld [vmem:[%s9 + $0x9c] sm:$0xf]
    %v2065 = vld [vmem:[%s9 + $0xa0] sm:$0xf]
    %v2066 = vld [vmem:[%s9 + $0xa4] sm:$0xf]
    %v2067 = vld [vmem:[%s9 + $0xa8] sm:$0xf]
    %v2068 = vld [vmem:[%s9 + $0xac] sm:$0xf]
    %v2069 = vld [vmem:[%s9 + $0xb0] sm:$0xf]
    %v2070 = vld [vmem:[%s9 + $0xb4] sm:$0xf]
    %v2071 = vld [vmem:[%s9 + $0xb8] sm:$0xf]
    %v2072 = vld [vmem:[%s9 + $0xbc] sm:$0xf]
    %v2073 = vld [vmem:[%s9 + $0xc0] sm:$0xf]
    %v2074 = vld [vmem:[%s9 + $0xc4] sm:$0xf]
    %v2075 = vld [vmem:[%s9 + $0xc8] sm:$0xf]
    %v2076 = vld [vmem:[%s9 + $0xcc] sm:$0xf]
    %v2077 = vld [vmem:[%s9 + $0xd0] sm:$0xf]
    %v2078 = vld [vmem:[%s9 + $0xd4] sm:$0xf]
    %v2079 = vld [vmem:[%s9 + $0xd8] sm:$0xf]
    %v2080 = vld [vmem:[%s9 + $0xdc] sm:$0xf]
    %v2081 = vld [vmem:[%s9 + $0xe0] sm:$0xf]
    %v2082 = vld [vmem:[%s9 + $0xe4] sm:$0xf]
    %v2083 = vld [vmem:[%s9 + $0xe8] sm:$0xf]
    %v2084 = vld [vmem:[%s9 + $0xec] sm:$0xf]
    %v2085 = vld [vmem:[%s9 + $0xf0] sm:$0xf]
    %v2086 = vld [vmem:[%s9 + $0xf4] sm:$0xf]
    %v2087 = vld [vmem:[%s9 + $0xf8] sm:$0xf]
    %v2088 = vld [vmem:[%s9 + $0xfc] sm:$0xf]
    %v2089 = vld [vmem:[%s9 + $0x100] sm:$0xf]
    %v2090 = vld [vmem:[%s9 + $0x104] sm:$0xf]
    %v2091 = vld [vmem:[%s9 + $0x108] sm:$0xf]
    %v2092 = vld [vmem:[%s9 + $0x10c] sm:$0xf]
    %v2093 = vld [vmem:[%s9 + $0x110] sm:$0xf]
    %v2094 = vld [vmem:[%s9 + $0x114] sm:$0xf]
    %v2095 = vld [vmem:[%s9 + $0x118] sm:$0xf]
    %v2096 = vld [vmem:[%s9 + $0x11c] sm:$0xf]
    %v2097 = vld [vmem:[%s9 + $0x120] sm:$0xf]
    %v2098 = vld [vmem:[%s9 + $0x124] sm:$0xf]
    %v2099 = vld [vmem:[%s9 + $0x128] sm:$0xf]
    %v2100 = vld [vmem:[%s9 + $0x12c] sm:$0xf]
    %v2101 = vld [vmem:[%s9 + $0x130] sm:$0xf]
    %v2102 = vld [vmem:[%s9 + $0x134] sm:$0xf]
    %v2103 = vld [vmem:[%s9 + $0x138] sm:$0xf]
    %v2104 = vld [vmem:[%s9 + $0x13c] sm:$0xf]
    %v2105 = vld [vmem:[%s9 + $0x140] sm:$0xf]
    %v2106 = vld [vmem:[%s9 + $0x144] sm:$0xf]
    %v2107 = vld [vmem:[%s9 + $0x148] sm:$0xf]
    %v2108 = vld [vmem:[%s9 + $0x14c] sm:$0xf]
    %v2109 = vld [vmem:[%s9 + $0x150] sm:$0xf]
    %v2110 = vld [vmem:[%s9 + $0x154] sm:$0xf]
    %v2111 = vld [vmem:[%s9 + $0x158] sm:$0xf]
    %v2112 = vld [vmem:[%s9 + $0x15c] sm:$0xf]
    %v2113 = vld [vmem:[%s9 + $0x160] sm:$0xf]
    %v2114 = vld [vmem:[%s9 + $0x164] sm:$0xf]
    %v2115 = vld [vmem:[%s9 + $0x168] sm:$0xf]
    %v2116 = vld [vmem:[%s9 + $0x16c] sm:$0xf]
    %v2117 = vld [vmem:[%s9 + $0x170] sm:$0xf]
    %v2118 = vld [vmem:[%s9 + $0x174] sm:$0xf]
    %v2119 = vld [vmem:[%s9 + $0x178] sm:$0xf]
    %v2120 = vld [vmem:[%s9 + $0x17c] sm:$0xf]
    %v2121 = vld [vmem:[%s9 + $0x180] sm:$0xf]
    %v2122 = vld [vmem:[%s9 + $0x184] sm:$0xf]
    %v2123 = vld [vmem:[%s9 + $0x188] sm:$0xf]
    %v2124 = vld [vmem:[%s9 + $0x18c] sm:$0xf]
    %v2125 = vld [vmem:[%s9 + $0x190] sm:$0xf]
    %v2126 = vld [vmem:[%s9 + $0x194] sm:$0xf]
    %v2127 = vld [vmem:[%s9 + $0x198] sm:$0xf]
    %v2128 = vld [vmem:[%s9 + $0x19c] sm:$0xf]
    %v2129 = vld [vmem:[%s9 + $0x1a0] sm:$0xf]
    %v2130 = vld [vmem:[%s9 + $0x1a4] sm:$0xf]
    %v2131 = vld [vmem:[%s9 + $0x1a8] sm:$0xf]
    %v2132 = vld [vmem:[%s9 + $0x1ac] sm:$0xf]
    %v2133 = vld [vmem:[%s9 + $0x1b0] sm:$0xf]
    %v2134 = vld [vmem:[%s9 + $0x1b4] sm:$0xf]
    %v2135 = vld [vmem:[%s9 + $0x1b8] sm:$0xf]
    %v2136 = vld [vmem:[%s9 + $0x1bc] sm:$0xf]
    %v2137 = vld [vmem:[%s9 + $0x1c0] sm:$0xf]
    %v2138 = vld [vmem:[%s9 + $0x1c4] sm:$0xf]
    %v2139 = vld [vmem:[%s9 + $0x1c8] sm:$0xf]
    %v2140 = vld [vmem:[%s9 + $0x1cc] sm:$0xf]
    %v2141 = vld [vmem:[%s9 + $0x1d0] sm:$0xf]
    %v2142 = vld [vmem:[%s9 + $0x1d4] sm:$0xf]
    %v2143 = vld [vmem:[%s9 + $0x1d8] sm:$0xf]
    %v2144 = vld [vmem:[%s9 + $0x1dc] sm:$0xf]
    %v2145 = vld [vmem:[%s9 + $0x1e0] sm:$0xf]
    %v2146 = vld [vmem:[%s9 + $0x1e4] sm:$0xf]
    %v2147 = vld [vmem:[%s9 + $0x1e8] sm:$0xf]
    %v2148 = vld [vmem:[%s9 + $0x1ec] sm:$0xf]
    %v2149 = vld [vmem:[%s9 + $0x1f0] sm:$0xf]
    %v2150 = vld [vmem:[%s9 + $0x1f4] sm:$0xf]
    %v2151 = vld [vmem:[%s9 + $0x1f8] sm:$0xf]
    %v2152 = vld [vmem:[%s9 + $0x1fc] sm:$0xf]
    %v2153 = vld [vmem:[%s9 + $0x200] sm:$0xf]
    %v2154 = vld [vmem:[%s9 + $0x204] sm:$0xf]
    %v2155 = vld [vmem:[%s9 + $0x208] sm:$0xf]
    %v2156 = vld [vmem:[%s9 + $0x20c] sm:$0xf]
    %v2157 = vld [vmem:[%s9 + $0x210] sm:$0xf]
    %v2158 = vld [vmem:[%s9 + $0x214] sm:$0xf]
    %v2159 = vld [vmem:[%s9 + $0x218] sm:$0xf]
    %v2160 = vld [vmem:[%s9 + $0x21c] sm:$0xf]
    %v2161 = vld [vmem:[%s9 + $0x220] sm:$0xf]
    %v2162 = vld [vmem:[%s9 + $0x224] sm:$0xf]
    %v2163 = vld [vmem:[%s9 + $0x228] sm:$0xf]
    %v2164 = vld [vmem:[%s9 + $0x22c] sm:$0xf]
    %v2165 = vld [vmem:[%s9 + $0x230] sm:$0xf]
    %v2166 = vld [vmem:[%s9 + $0x234] sm:$0xf]
    %v2167 = vld [vmem:[%s9 + $0x238] sm:$0xf]
    %v2168 = vld [vmem:[%s9 + $0x23c] sm:$0xf]
    %v2169 = vld [vmem:[%s10] sm:$0x1]
    %v2171 = vlaneseq
    %v2172 = vshrl.u32 %v2171, 7
    %v2173 = vsub.s32 0, %v2172
    %v2174 = vrot.slane %v2169, %v2173
    %v2320 = vunpack.c.l.b16 %v2025
    %v2321 = vunpack.c.l.b16 %v2026
    %v2322 = vunpack.c.l.b16 %v2027
    %v2323 = vunpack.c.l.b16 %v2028
    %v2324 = vunpack.c.l.b16 %v2029
    %v2325 = vunpack.c.l.b16 %v2030
    %v2326 = vunpack.c.l.b16 %v2031
    %v2327 = vunpack.c.l.b16 %v2032
    %v2328 = vunpack.c.l.b16 %v2033
    %v2329 = vunpack.c.l.b16 %v2034
    %v2330 = vunpack.c.l.b16 %v2035
    %v2331 = vunpack.c.l.b16 %v2036
    %v2332 = vunpack.c.l.b16 %v2037
    %v2333 = vunpack.c.l.b16 %v2038
    %v2334 = vunpack.c.l.b16 %v2039
    %v2335 = vunpack.c.l.b16 %v2040
    %v2336 = vunpack.c.l.b16 %v2041
    %v2337 = vunpack.c.l.b16 %v2042
    %v2338 = vunpack.c.l.b16 %v2043
    %v2339 = vunpack.c.l.b16 %v2044
    %v2340 = vunpack.c.l.b16 %v2045
    %v2341 = vunpack.c.l.b16 %v2046
    %v2342 = vunpack.c.l.b16 %v2047
    %v2343 = vunpack.c.l.b16 %v2048
    %v2344 = vunpack.c.l.b16 %v2049
    %v2345 = vunpack.c.l.b16 %v2050
    %v2346 = vunpack.c.l.b16 %v2051
    %v2347 = vunpack.c.l.b16 %v2052
    %v2348 = vunpack.c.l.b16 %v2053
    %v2349 = vunpack.c.l.b16 %v2054
    %v2350 = vunpack.c.l.b16 %v2055
    %v2351 = vunpack.c.l.b16 %v2056
    %v2352 = vunpack.c.l.b16 %v2057
    %v2353 = vunpack.c.l.b16 %v2058
    %v2354 = vunpack.c.l.b16 %v2059
    %v2355 = vunpack.c.l.b16 %v2060
    %v2356 = vunpack.c.l.b16 %v2061
    %v2357 = vunpack.c.l.b16 %v2062
    %v2358 = vunpack.c.l.b16 %v2063
    %v2359 = vunpack.c.l.b16 %v2064
    %v2360 = vunpack.c.l.b16 %v2065
    %v2361 = vunpack.c.l.b16 %v2066
    %v2362 = vunpack.c.l.b16 %v2067
    %v2363 = vunpack.c.l.b16 %v2068
    %v2364 = vunpack.c.l.b16 %v2069
    %v2365 = vunpack.c.l.b16 %v2070
    %v2366 = vunpack.c.l.b16 %v2071
    %v2367 = vunpack.c.l.b16 %v2072
    %v2368 = vunpack.c.l.b16 %v2073
    %v2369 = vunpack.c.l.b16 %v2074
    %v2370 = vunpack.c.l.b16 %v2075
    %v2371 = vunpack.c.l.b16 %v2076
    %v2372 = vunpack.c.l.b16 %v2077
    %v2373 = vunpack.c.l.b16 %v2078
    %v2374 = vunpack.c.l.b16 %v2079
    %v2375 = vunpack.c.l.b16 %v2080
    %v2376 = vunpack.c.l.b16 %v2081
    %v2377 = vunpack.c.l.b16 %v2082
    %v2378 = vunpack.c.l.b16 %v2083
    %v2379 = vunpack.c.l.b16 %v2084
    %v2380 = vunpack.c.l.b16 %v2085
    %v2381 = vunpack.c.l.b16 %v2086
    %v2382 = vunpack.c.l.b16 %v2087
    %v2383 = vunpack.c.l.b16 %v2088
    %v2384 = vunpack.c.l.b16 %v2089
    %v2385 = vunpack.c.l.b16 %v2090
    %v2386 = vunpack.c.l.b16 %v2091
    %v2387 = vunpack.c.l.b16 %v2092
    %v2388 = vunpack.c.l.b16 %v2093
    %v2389 = vunpack.c.l.b16 %v2094
    %v2390 = vunpack.c.l.b16 %v2095
    %v2391 = vunpack.c.l.b16 %v2096
    %v2392 = vunpack.c.l.b16 %v2097
    %v2393 = vunpack.c.l.b16 %v2098
    %v2394 = vunpack.c.l.b16 %v2099
    %v2395 = vunpack.c.l.b16 %v2100
    %v2396 = vunpack.c.l.b16 %v2101
    %v2397 = vunpack.c.l.b16 %v2102
    %v2398 = vunpack.c.l.b16 %v2103
    %v2399 = vunpack.c.l.b16 %v2104
    %v2400 = vunpack.c.l.b16 %v2105
    %v2401 = vunpack.c.l.b16 %v2106
    %v2402 = vunpack.c.l.b16 %v2107
    %v2403 = vunpack.c.l.b16 %v2108
    %v2404 = vunpack.c.l.b16 %v2109
    %v2405 = vunpack.c.l.b16 %v2110
    %v2406 = vunpack.c.l.b16 %v2111
    %v2407 = vunpack.c.l.b16 %v2112
    %v2408 = vunpack.c.l.b16 %v2113
    %v2409 = vunpack.c.l.b16 %v2114
    %v2410 = vunpack.c.l.b16 %v2115
    %v2411 = vunpack.c.l.b16 %v2116
    %v2412 = vunpack.c.l.b16 %v2117
    %v2413 = vunpack.c.l.b16 %v2118
    %v2414 = vunpack.c.l.b16 %v2119
    %v2415 = vunpack.c.l.b16 %v2120
    %v2416 = vunpack.c.l.b16 %v2121
    %v2417 = vunpack.c.l.b16 %v2122
    %v2418 = vunpack.c.l.b16 %v2123
    %v2419 = vunpack.c.l.b16 %v2124
    %v2420 = vunpack.c.l.b16 %v2125
    %v2421 = vunpack.c.l.b16 %v2126
    %v2422 = vunpack.c.l.b16 %v2127
    %v2423 = vunpack.c.l.b16 %v2128
    %v2424 = vunpack.c.l.b16 %v2129
    %v2425 = vunpack.c.l.b16 %v2130
    %v2426 = vunpack.c.l.b16 %v2131
    %v2427 = vunpack.c.l.b16 %v2132
    %v2428 = vunpack.c.l.b16 %v2133
    %v2429 = vunpack.c.l.b16 %v2134
    %v2430 = vunpack.c.l.b16 %v2135
    %v2431 = vunpack.c.l.b16 %v2136
    %v2432 = vunpack.c.l.b16 %v2137
    %v2433 = vunpack.c.l.b16 %v2138
    %v2434 = vunpack.c.l.b16 %v2139
    %v2435 = vunpack.c.l.b16 %v2140
    %v2436 = vunpack.c.l.b16 %v2141
    %v2437 = vunpack.c.l.b16 %v2142
    %v2438 = vunpack.c.l.b16 %v2143
    %v2439 = vunpack.c.l.b16 %v2144
    %v2440 = vunpack.c.l.b16 %v2145
    %v2441 = vunpack.c.l.b16 %v2146
    %v2442 = vunpack.c.l.b16 %v2147
    %v2443 = vunpack.c.l.b16 %v2148
    %v2444 = vunpack.c.l.b16 %v2149
    %v2445 = vunpack.c.l.b16 %v2150
    %v2446 = vunpack.c.l.b16 %v2151
    %v2447 = vunpack.c.l.b16 %v2152
    %v2448 = vunpack.c.l.b16 %v2153
    %v2449 = vunpack.c.l.b16 %v2154
    %v2450 = vunpack.c.l.b16 %v2155
    %v2451 = vunpack.c.l.b16 %v2156
    %v2452 = vunpack.c.l.b16 %v2157
    %v2453 = vunpack.c.l.b16 %v2158
    %v2454 = vunpack.c.l.b16 %v2159
    %v2455 = vunpack.c.l.b16 %v2160
    %v2456 = vunpack.c.l.b16 %v2161
    %v2457 = vunpack.c.l.b16 %v2162
    %v2458 = vunpack.c.l.b16 %v2163
    %v2459 = vunpack.c.l.b16 %v2164
    %v2460 = vunpack.c.l.b16 %v2165
    %v2461 = vunpack.c.l.b16 %v2166
    %v2462 = vunpack.c.l.b16 %v2167
    %v2463 = vunpack.c.l.b16 %v2168
    %v2464 = vpack.c.b16 %v2321, %v2320
    %v2465 = vpack.c.b16 %v2323, %v2322
    %v2466 = vpack.c.b16 %v2325, %v2324
    %v2467 = vpack.c.b16 %v2327, %v2326
    %v2468 = vpack.c.b16 %v2329, %v2328
    %v2469 = vpack.c.b16 %v2331, %v2330
    %v2470 = vpack.c.b16 %v2333, %v2332
    %v2471 = vpack.c.b16 %v2335, %v2334
    %v2472 = vpack.c.b16 %v2337, %v2336
    %v2473 = vpack.c.b16 %v2339, %v2338
    %v2474 = vpack.c.b16 %v2341, %v2340
    %v2475 = vpack.c.b16 %v2343, %v2342
    %v2476 = vpack.c.b16 %v2345, %v2344
    %v2477 = vpack.c.b16 %v2347, %v2346
    %v2478 = vpack.c.b16 %v2349, %v2348
    %v2479 = vpack.c.b16 %v2351, %v2350
    %v2480 = vpack.c.b16 %v2353, %v2352
    %v2481 = vpack.c.b16 %v2355, %v2354
    %v2482 = vpack.c.b16 %v2357, %v2356
    %v2483 = vpack.c.b16 %v2359, %v2358
    %v2484 = vpack.c.b16 %v2361, %v2360
    %v2485 = vpack.c.b16 %v2363, %v2362
    %v2486 = vpack.c.b16 %v2365, %v2364
    %v2487 = vpack.c.b16 %v2367, %v2366
    %v2488 = vpack.c.b16 %v2369, %v2368
    %v2489 = vpack.c.b16 %v2371, %v2370
    %v2490 = vpack.c.b16 %v2373, %v2372
    %v2491 = vpack.c.b16 %v2375, %v2374
    %v2492 = vpack.c.b16 %v2377, %v2376
    %v2493 = vpack.c.b16 %v2379, %v2378
    %v2494 = vpack.c.b16 %v2381, %v2380
    %v2495 = vpack.c.b16 %v2383, %v2382
    %v2496 = vpack.c.b16 %v2385, %v2384
    %v2497 = vpack.c.b16 %v2387, %v2386
    %v2498 = vpack.c.b16 %v2389, %v2388
    %v2499 = vpack.c.b16 %v2391, %v2390
    %v2500 = vpack.c.b16 %v2393, %v2392
    %v2501 = vpack.c.b16 %v2395, %v2394
    %v2502 = vpack.c.b16 %v2397, %v2396
    %v2503 = vpack.c.b16 %v2399, %v2398
    %v2504 = vpack.c.b16 %v2401, %v2400
    %v2505 = vpack.c.b16 %v2403, %v2402
    %v2506 = vpack.c.b16 %v2405, %v2404
    %v2507 = vpack.c.b16 %v2407, %v2406
    %v2508 = vpack.c.b16 %v2409, %v2408
    %v2509 = vpack.c.b16 %v2411, %v2410
    %v2510 = vpack.c.b16 %v2413, %v2412
    %v2511 = vpack.c.b16 %v2415, %v2414
    %v2512 = vpack.c.b16 %v2417, %v2416
    %v2513 = vpack.c.b16 %v2419, %v2418
    %v2514 = vpack.c.b16 %v2421, %v2420
    %v2515 = vpack.c.b16 %v2423, %v2422
    %v2516 = vpack.c.b16 %v2425, %v2424
    %v2517 = vpack.c.b16 %v2427, %v2426
    %v2518 = vpack.c.b16 %v2429, %v2428
    %v2519 = vpack.c.b16 %v2431, %v2430
    %v2520 = vpack.c.b16 %v2433, %v2432
    %v2521 = vpack.c.b16 %v2435, %v2434
    %v2522 = vpack.c.b16 %v2437, %v2436
    %v2523 = vpack.c.b16 %v2439, %v2438
    %v2524 = vpack.c.b16 %v2441, %v2440
    %v2525 = vpack.c.b16 %v2443, %v2442
    %v2526 = vpack.c.b16 %v2445, %v2444
    %v2527 = vpack.c.b16 %v2447, %v2446
    %v2528 = vpack.c.b16 %v2449, %v2448
    %v2529 = vpack.c.b16 %v2451, %v2450
    %v2530 = vpack.c.b16 %v2453, %v2452
    %v2531 = vpack.c.b16 %v2455, %v2454
    %v2532 = vpack.c.b16 %v2457, %v2456
    %v2533 = vpack.c.b16 %v2459, %v2458
    %v2534 = vpack.c.b16 %v2461, %v2460
    %v2535 = vpack.c.b16 %v2463, %v2462
    %2608 = vmatprep.subr.bf16.mxu0 0
    %2609 = vmatpush1.bf16.msra.mxu0 %v2471
    %2610 = vmatprep.subr.bf16.mxu0 0
    %2611 = vmatpush1.bf16.msra.mxu0 %v2470
    %2612 = vmatprep.subr.bf16.mxu0 0
    %2613 = vmatpush1.bf16.msra.mxu0 %v2469
    %2614 = vmatprep.subr.bf16.mxu0 0
    %2615 = vmatpush1.bf16.msra.mxu0 %v2468
    %2616 = vmatprep.subr.bf16.mxu0 0
    %2617 = vmatpush1.bf16.msra.mxu0 %v2467
    %2618 = vmatprep.subr.bf16.mxu0 0
    %2619 = vmatpush1.bf16.msra.mxu0 %v2466
    %2620 = vmatprep.subr.bf16.mxu0 0
    %2621 = vmatpush1.bf16.msra.mxu0 %v2465
    %2622 = vmatprep.subr.bf16.mxu0 0
    %2623 = vmatpush1.bf16.msra.mxu0 %v2464
    %2624 = vmatprep.subr.bf16.mxu0 0
    %2625 = vmatpush2.bf16.msra.mxu0 %v2479
    %2626 = vmatprep.subr.bf16.mxu0 0
    %2627 = vmatpush2.bf16.msra.mxu0 %v2478
    %2628 = vmatprep.subr.bf16.mxu0 0
    %2629 = vmatpush2.bf16.msra.mxu0 %v2477
    %2630 = vmatprep.subr.bf16.mxu0 0
    %2631 = vmatpush2.bf16.msra.mxu0 %v2476
    %2632 = vmatprep.subr.bf16.mxu0 0
    %2633 = vmatpush2.bf16.msra.mxu0 %v2475
    %2634 = vmatprep.subr.bf16.mxu0 0
    %2635 = vmatpush2.bf16.msra.mxu0 %v2474
    %2636 = vmatprep.subr.bf16.mxu0 0
    %2637 = vmatpush2.bf16.msra.mxu0 %v2473
    %2638 = vmatprep.subr.bf16.mxu0 0
    %2639 = vmatpush2.bf16.msra.mxu0 %v2472
    %2640 = vmatprep.mubr.bf16.mxu0 %v1883
    %2641 = vmatmul.mubr.bf16.gmra.mxu0 %v1867
    %v2642 = vpop.f32.mrf.mxu0
    %v2643 = vadd.f32 %v2174, %v2642
    %v2644 = vpop.f32.mrf.mxu0
    %v2645 = vpop.f32.mrf.mxu0
    %v2646 = vadd.f32 %v2174, %v2645
    %v2647 = vpop.f32.mrf.mxu0
    %2648 = vmatprep.mubr.bf16.mxu0 %v1891
    %2649 = vmatmul.mubr.bf16.gmra.mxu0 %v1868
    %v2650 = vpop.f32.mrf.mxu0
    %v2651 = vadd.f32 %v2174, %v2650
    %v2652 = vpop.f32.mrf.mxu0
    %v2653 = vpop.f32.mrf.mxu0
    %v2654 = vadd.f32 %v2174, %v2653
    %v2655 = vpop.f32.mrf.mxu0
    %2656 = vmatprep.mubr.bf16.mxu0 %v1899
    %2657 = vmatmul.mubr.bf16.gmra.mxu0 %v1869
    %v2658 = vpop.f32.mrf.mxu0
    %v2659 = vadd.f32 %v2174, %v2658
    %v2660 = vpop.f32.mrf.mxu0
    %v2661 = vpop.f32.mrf.mxu0
    %v2662 = vadd.f32 %v2174, %v2661
    %v2663 = vpop.f32.mrf.mxu0
    %2664 = vmatprep.mubr.bf16.mxu0 %v1907
    %2665 = vmatmul.mubr.bf16.gmra.mxu0 %v1870
    %v2666 = vpop.f32.mrf.mxu0
    %v2667 = vadd.f32 %v2174, %v2666
    %v2668 = vpop.f32.mrf.mxu0
    %v2669 = vpop.f32.mrf.mxu0
    %v2670 = vadd.f32 %v2174, %v2669
    %v2671 = vpop.f32.mrf.mxu0
    %2672 = vdwg.mxu0
    %2673 = vmatprep.subr.bf16.mxu0 0
    %2674 = vmatpush1.bf16.msra.mxu0 %v2487
    %2675 = vmatprep.subr.bf16.mxu0 0
    %2676 = vmatpush1.bf16.msra.mxu0 %v2486
    %2677 = vmatprep.subr.bf16.mxu0 0
    %2678 = vmatpush1.bf16.msra.mxu0 %v2485
    %2679 = vmatprep.subr.bf16.mxu0 0
    %2680 = vmatpush1.bf16.msra.mxu0 %v2484
    %2681 = vmatprep.subr.bf16.mxu0 0
    %2682 = vmatpush1.bf16.msra.mxu0 %v2483
    %2683 = vmatprep.subr.bf16.mxu0 0
    %2684 = vmatpush1.bf16.msra.mxu0 %v2482
    %2685 = vmatprep.subr.bf16.mxu0 0
    %2686 = vmatpush1.bf16.msra.mxu0 %v2481
    %2687 = vmatprep.subr.bf16.mxu0 0
    %2688 = vmatpush1.bf16.msra.mxu0 %v2480
    %2689 = vmatprep.subr.bf16.mxu0 0
    %2690 = vmatpush2.bf16.msra.mxu0 %v2495
    %2691 = vmatprep.subr.bf16.mxu0 0
    %2692 = vmatpush2.bf16.msra.mxu0 %v2494
    %2693 = vmatprep.subr.bf16.mxu0 0
    %2694 = vmatpush2.bf16.msra.mxu0 %v2493
    %2695 = vmatprep.subr.bf16.mxu0 0
    %2696 = vmatpush2.bf16.msra.mxu0 %v2492
    %2697 = vmatprep.subr.bf16.mxu0 0
    %2698 = vmatpush2.bf16.msra.mxu0 %v2491
    %2699 = vmatprep.subr.bf16.mxu0 0
    %2700 = vmatpush2.bf16.msra.mxu0 %v2490
    %2701 = vmatprep.subr.bf16.mxu0 0
    %2702 = vmatpush2.bf16.msra.mxu0 %v2489
    %2703 = vmatprep.subr.bf16.mxu0 0
    %2704 = vmatpush2.bf16.msra.mxu0 %v2488
    %2705 = vmatprep.mubr.bf16.mxu0 %v1937
    %2706 = vmatmul.mubr.bf16.gmra.mxu0 %v1920
    %v2707 = vpop.f32.mrf.mxu0
    %v2708 = vadd.f32 %v2643, %v2707
    %v2709 = vpop.f32.mrf.mxu0
    %v2710 = vpop.f32.mrf.mxu0
    %v2711 = vadd.f32 %v2646, %v2710
    %v2712 = vpop.f32.mrf.mxu0
    %2713 = vmatprep.mubr.bf16.mxu0 %v1941
    %2714 = vmatmul.mubr.bf16.gmra.mxu0 %v1922
    %v2715 = vpop.f32.mrf.mxu0
    %v2716 = vadd.f32 %v2651, %v2715
    %v2717 = vpop.f32.mrf.mxu0
    %v2718 = vpop.f32.mrf.mxu0
    %v2719 = vadd.f32 %v2654, %v2718
    %v2720 = vpop.f32.mrf.mxu0
    %2721 = vmatprep.mubr.bf16.mxu0 %v1945
    %2722 = vmatmul.mubr.bf16.gmra.mxu0 %v1924
    %v2723 = vpop.f32.mrf.mxu0
    %v2724 = vadd.f32 %v2659, %v2723
    %v2725 = vpop.f32.mrf.mxu0
    %v2726 = vpop.f32.mrf.mxu0
    %v2727 = vadd.f32 %v2662, %v2726
    %v2728 = vpop.f32.mrf.mxu0
    %2729 = vmatprep.mubr.bf16.mxu0 %v1951
    %2730 = vmatmul.mubr.bf16.gmra.mxu0 %v1926
    %v2731 = vpop.f32.mrf.mxu0
    %v2732 = vadd.f32 %v2667, %v2731
    %v2733 = vpop.f32.mrf.mxu0
    %v2734 = vpop.f32.mrf.mxu0
    %v2735 = vadd.f32 %v2670, %v2734
    %v2736 = vpop.f32.mrf.mxu0
    %2737 = vdwg.mxu0
    %2738 = vmatprep.subr.bf16.mxu0 0
    %2739 = vmatpush1.bf16.msra.mxu0 %v2503
    %2740 = vmatprep.subr.bf16.mxu0 0
    %2741 = vmatpush1.bf16.msra.mxu0 %v2502
    %2742 = vmatprep.subr.bf16.mxu0 0
    %2743 = vmatpush1.bf16.msra.mxu0 %v2501
    %2744 = vmatprep.subr.bf16.mxu0 0
    %2745 = vmatpush1.bf16.msra.mxu0 %v2500
    %2746 = vmatprep.subr.bf16.mxu0 0
    %2747 = vmatpush1.bf16.msra.mxu0 %v2499
    %2748 = vmatprep.subr.bf16.mxu0 0
    %2749 = vmatpush1.bf16.msra.mxu0 %v2498
    %2750 = vmatprep.subr.bf16.mxu0 0
    %2751 = vmatpush1.bf16.msra.mxu0 %v2497
    %2752 = vmatprep.subr.bf16.mxu0 0
    %2753 = vmatpush1.bf16.msra.mxu0 %v2496
    %2754 = vmatprep.subr.bf16.mxu0 0
    %2755 = vmatpush2.bf16.msra.mxu0 %v2511
    %2756 = vmatprep.subr.bf16.mxu0 0
    %2757 = vmatpush2.bf16.msra.mxu0 %v2510
    %2758 = vmatprep.subr.bf16.mxu0 0
    %2759 = vmatpush2.bf16.msra.mxu0 %v2509
    %2760 = vmatprep.subr.bf16.mxu0 0
    %2761 = vmatpush2.bf16.msra.mxu0 %v2508
    %2762 = vmatprep.subr.bf16.mxu0 0
    %2763 = vmatpush2.bf16.msra.mxu0 %v2507
    %2764 = vmatprep.subr.bf16.mxu0 0
    %2765 = vmatpush2.bf16.msra.mxu0 %v2506
    %2766 = vmatprep.subr.bf16.mxu0 0
    %2767 = vmatpush2.bf16.msra.mxu0 %v2505
    %2768 = vmatprep.subr.bf16.mxu0 0
    %2769 = vmatpush2.bf16.msra.mxu0 %v2504
    %2770 = vmatprep.mubr.bf16.mxu0 %v1976
    %2771 = vmatmul.mubr.bf16.gmra.mxu0 %v1958
    %v2772 = vpop.f32.mrf.mxu0
    %v2773 = vadd.f32 %v2708, %v2772
    %v2774 = vpop.f32.mrf.mxu0
    %v2775 = vpop.f32.mrf.mxu0
    %v2776 = vadd.f32 %v2711, %v2775
    %v2777 = vpop.f32.mrf.mxu0
    %2778 = vmatprep.mubr.bf16.mxu0 %v1980
    %2779 = vmatmul.mubr.bf16.gmra.mxu0 %v1960
    %v2780 = vpop.f32.mrf.mxu0
    %v2781 = vadd.f32 %v2716, %v2780
    %v2782 = vpop.f32.mrf.mxu0
    %v2783 = vpop.f32.mrf.mxu0
    %v2784 = vadd.f32 %v2719, %v2783
    %v2785 = vpop.f32.mrf.mxu0
    %2786 = vmatprep.mubr.bf16.mxu0 %v1984
    %2787 = vmatmul.mubr.bf16.gmra.mxu0 %v1962
    %v2788 = vpop.f32.mrf.mxu0
    %v2789 = vadd.f32 %v2724, %v2788
    %v2790 = vpop.f32.mrf.mxu0
    %v2791 = vpop.f32.mrf.mxu0
    %v2792 = vadd.f32 %v2727, %v2791
    %v2793 = vpop.f32.mrf.mxu0
    %2794 = vmatprep.mubr.bf16.mxu0 %v1988
    %2795 = vmatmul.mubr.bf16.gmra.mxu0 %v1964
    %v2796 = vpop.f32.mrf.mxu0
    %v2797 = vadd.f32 %v2732, %v2796
    %v2798 = vpop.f32.mrf.mxu0
    %v2799 = vpop.f32.mrf.mxu0
    %v2800 = vadd.f32 %v2735, %v2799
    %v2801 = vpop.f32.mrf.mxu0
    %2802 = vdwg.mxu0
    %2803 = vmatprep.subr.bf16.mxu0 0
    %2804 = vmatpush1.bf16.msra.mxu0 %v2519
    %2805 = vmatprep.subr.bf16.mxu0 0
    %2806 = vmatpush1.bf16.msra.mxu0 %v2518
    %2807 = vmatprep.subr.bf16.mxu0 0
    %2808 = vmatpush1.bf16.msra.mxu0 %v2517
    %2809 = vmatprep.subr.bf16.mxu0 0
    %2810 = vmatpush1.bf16.msra.mxu0 %v2516
    %2811 = vmatprep.subr.bf16.mxu0 0
    %2812 = vmatpush1.bf16.msra.mxu0 %v2515
    %2813 = vmatprep.subr.bf16.mxu0 0
    %2814 = vmatpush1.bf16.msra.mxu0 %v2514
    %2815 = vmatprep.subr.bf16.mxu0 0
    %2816 = vmatpush1.bf16.msra.mxu0 %v2513
    %2817 = vmatprep.subr.bf16.mxu0 0
    %2818 = vmatpush1.bf16.msra.mxu0 %v2512
    %2819 = vmatprep.subr.bf16.mxu0 0
    %2820 = vmatpush2.bf16.msra.mxu0 %v2527
    %2821 = vmatprep.subr.bf16.mxu0 0
    %2822 = vmatpush2.bf16.msra.mxu0 %v2526
    %2823 = vmatprep.subr.bf16.mxu0 0
    %2824 = vmatpush2.bf16.msra.mxu0 %v2525
    %2825 = vmatprep.subr.bf16.mxu0 0
    %2826 = vmatpush2.bf16.msra.mxu0 %v2524
    %2827 = vmatprep.subr.bf16.mxu0 0
    %2828 = vmatpush2.bf16.msra.mxu0 %v2523
    %2829 = vmatprep.subr.bf16.mxu0 0
    %2830 = vmatpush2.bf16.msra.mxu0 %v2522
    %2831 = vmatprep.subr.bf16.mxu0 0
    %2832 = vmatpush2.bf16.msra.mxu0 %v2521
    %2833 = vmatprep.subr.bf16.mxu0 0
    %2834 = vmatpush2.bf16.msra.mxu0 %v2520
    %2835 = vmatprep.mubr.bf16.mxu0 %v2011
    %2836 = vmatmul.mubr.bf16.gmra.mxu0 %v1996
    %v2837 = vpop.f32.mrf.mxu0
    %v2838 = vadd.f32 %v2773, %v2837
    %v2839 = vpop.f32.mrf.mxu0
    %v2840 = vpop.f32.mrf.mxu0
    %v2841 = vadd.f32 %v2776, %v2840
    %v2842 = vpop.f32.mrf.mxu0
    %2843 = vmatprep.mubr.bf16.mxu0 %v2014
    %2844 = vmatmul.mubr.bf16.gmra.mxu0 %v1998
    %v2845 = vpop.f32.mrf.mxu0
    %v2846 = vadd.f32 %v2781, %v2845
    %v2847 = vpop.f32.mrf.mxu0
    %v2848 = vpop.f32.mrf.mxu0
    %v2849 = vadd.f32 %v2784, %v2848
    %v2850 = vpop.f32.mrf.mxu0
    %2851 = vmatprep.mubr.bf16.mxu0 %v2017
    %2852 = vmatmul.mubr.bf16.gmra.mxu0 %v2000
    %v2853 = vpop.f32.mrf.mxu0
    %v2854 = vadd.f32 %v2789, %v2853
    %v2855 = vpop.f32.mrf.mxu0
    %v2856 = vpop.f32.mrf.mxu0
    %v2857 = vadd.f32 %v2792, %v2856
    %v2858 = vpop.f32.mrf.mxu0
    %2859 = vmatprep.mubr.bf16.mxu0 %v2020
    %2860 = vmatmul.mubr.bf16.gmra.mxu0 %v2002
    %v2861 = vpop.f32.mrf.mxu0
    %v2862 = vadd.f32 %v2797, %v2861
    %v2863 = vpop.f32.mrf.mxu0
    %v2864 = vpop.f32.mrf.mxu0
    %v2865 = vadd.f32 %v2800, %v2864
    %v2866 = vpop.f32.mrf.mxu0
    %2867 = vdwg.mxu0
    %2868 = vmatprep.subr.bf16.mxu0 0
    %2869 = vmatpush1.bf16.msra.mxu0 %v2535
    %2870 = vmatprep.subr.bf16.mxu0 0
    %2871 = vmatpush1.bf16.msra.mxu0 %v2534
    %2872 = vmatprep.subr.bf16.mxu0 0
    %2873 = vmatpush1.bf16.msra.mxu0 %v2533
    %2874 = vmatprep.subr.bf16.mxu0 0
    %2875 = vmatpush1.bf16.msra.mxu0 %v2532
    %2876 = vmatprep.subr.bf16.mxu0 0
    %2877 = vmatpush1.bf16.msra.mxu0 %v2531
    %2878 = vmatprep.subr.bf16.mxu0 0
    %2879 = vmatpush1.bf16.msra.mxu0 %v2530
    %2880 = vmatprep.subr.bf16.mxu0 0
    %2881 = vmatpush1.bf16.msra.mxu0 %v2529
    %2882 = vmatprep.subr.bf16.mxu0 0
    %2883 = vmatpush1.bf16.msra.mxu0 %v2528
    %2884 = vmatprep.subr.bf16.mxu0 0
    %2885 = vmatpush2.bf16.msra.mxu0 0
    %2886 = vmatprep.subr.bf16.mxu0 0
    %2887 = vmatpush2.bf16.msra.mxu0 0
    %2888 = vmatprep.subr.bf16.mxu0 0
    %2889 = vmatpush2.bf16.msra.mxu0 0
    %2890 = vmatprep.subr.bf16.mxu0 0
    %2891 = vmatpush2.bf16.msra.mxu0 0
    %2892 = vmatprep.subr.bf16.mxu0 0
    %2893 = vmatpush2.bf16.msra.mxu0 0
    %2894 = vmatprep.subr.bf16.mxu0 0
    %2895 = vmatpush2.bf16.msra.mxu0 0
    %2896 = vmatprep.subr.bf16.mxu0 0
    %2897 = vmatpush2.bf16.msra.mxu0 0
    %2898 = vmatprep.subr.bf16.mxu0 0
    %2899 = vmatpush2.bf16.msra.mxu0 0
    %2900 = vmatprep.mubr.bf16.mxu0 0
    %2901 = vmatmul.mubr.bf16.gmra.mxu0 %v1868
    %v2902 = vpop.f32.mrf.mxu0
    %v2903 = vadd.f32 %v2838, %v2902
    %v2904 = vpop.f32.mrf.mxu0
    %v2905 = vpop.f32.mrf.mxu0
    %v2906 = vadd.f32 %v2841, %v2905
    %v2907 = vpop.f32.mrf.mxu0
    %2908 = vmatprep.mubr.bf16.mxu0 0
    %2909 = vmatmul.mubr.bf16.gmra.mxu0 %v1869
    %v2910 = vpop.f32.mrf.mxu0
    %v2911 = vadd.f32 %v2846, %v2910
    %v2912 = vpop.f32.mrf.mxu0
    %v2913 = vpop.f32.mrf.mxu0
    %v2914 = vadd.f32 %v2849, %v2913
    %v2915 = vpop.f32.mrf.mxu0
    %2916 = vmatprep.mubr.bf16.mxu0 0
    %2917 = vmatmul.mubr.bf16.gmra.mxu0 %v1870
    %v2918 = vpop.f32.mrf.mxu0
    %v2919 = vadd.f32 %v2854, %v2918
    %v2920 = vpop.f32.mrf.mxu0
    %v2921 = vpop.f32.mrf.mxu0
    %v2922 = vadd.f32 %v2857, %v2921
    %v2923 = vpop.f32.mrf.mxu0
    %2924 = vmatprep.mubr.bf16.mxu0 0
    %2925 = vmatmul.mubr.bf16.gmra.mxu0 %v1871
    %v2926 = vpop.f32.mrf.mxu0
    %v2927 = vadd.f32 %v2862, %v2926
    %v2928 = vpop.f32.mrf.mxu0
    %v2929 = vpop.f32.mrf.mxu0
    %v2930 = vadd.f32 %v2865, %v2929
    %v2931 = vpop.f32.mrf.mxu0
    %2932 = vdwg.mxu0
    %v2933 = vmax.f32 %v2903, 0.0
    %v2934 = vmax.f32 %v2906, 0.0
    %v2935 = vmax.f32 %v2911, 0.0
    %v2936 = vmax.f32 %v2914, 0.0
    %v2937 = vmax.f32 %v2919, 0.0
    %v2938 = vmax.f32 %v2922, 0.0
    %v2939 = vmax.f32 %v2927, 0.0
    %v2940 = vmax.f32 %v2930, 0.0
    %v2941 = vpack.c.bf16 %v2934, %v2933
    %v2942 = vpack.c.bf16 %v2936, %v2935
    %v2943 = vpack.c.bf16 %v2938, %v2937
    %v2944 = vpack.c.bf16 %v2940, %v2939
    %v2945 = vld [vmem:[%s11] sm:$0xf]
    %v2946 = vld [vmem:[%s11 + $0x4] sm:$0xf]
    %v2947 = vld [vmem:[%s11 + $0x8] sm:$0xf]
    %v2948 = vld [vmem:[%s11 + $0xc] sm:$0xf]
    %v2949 = vld [vmem:[%s12] sm:$0x1]
    %v2951 = vlaneseq
    %v2952 = vshrl.u32 %v2951, 7
    %v2953 = vsub.s32 0, %v2952
    %v2954 = vrot.slane %v2949, %v2953
    %v2960 = vunpack.c.l.b16 %v2945
    %v2961 = vunpack.c.l.b16 %v2946
    %v2962 = vunpack.c.l.b16 %v2947
    %v2963 = vunpack.c.l.b16 %v2948
    %v2964 = vpack.c.b16 %v2961, %v2960
    %v2965 = vpack.c.b16 %v2963, %v2962
    %vm2968 = vcmask 261120
    %v2970 = vsel %vm2968, %v2941, 0
    %v2973 = vsel %vm2968, %v2942, 0
    %v2976 = vsel %vm2968, %v2943, 0
    %v2979 = vsel %vm2968, %v2944, 0
    %2981 = vmatprep.subr.bf16.mxu0 0
    %2982 = vmatpush1.bf16.msra.mxu0 0
    %2983 = vmatprep.subr.bf16.mxu0 0
    %2984 = vmatpush1.bf16.msra.mxu0 0
    %2985 = vmatprep.subr.bf16.mxu0 0
    %2986 = vmatpush1.bf16.msra.mxu0 0
    %2987 = vmatprep.subr.bf16.mxu0 0
    %2988 = vmatpush1.bf16.msra.mxu0 0
    %2989 = vmatprep.subr.bf16.mxu0 0
    %2990 = vmatpush1.bf16.msra.mxu0 0
    %2991 = vmatprep.subr.bf16.mxu0 0
    %2992 = vmatpush1.bf16.msra.mxu0 0
    %2993 = vmatprep.subr.bf16.mxu0 0
    %2994 = vmatpush1.bf16.msra.mxu0 %v2965
    %2995 = vmatprep.subr.bf16.mxu0 0
    %2996 = vmatpush1.bf16.msra.mxu0 %v2964
    %2997 = vmatprep.subr.bf16.mxu0 0
    %2998 = vmatpush2.bf16.msra.mxu0 0
    %2999 = vmatprep.subr.bf16.mxu0 0
    %3000 = vmatpush2.bf16.msra.mxu0 0
    %3001 = vmatprep.subr.bf16.mxu0 0
    %3002 = vmatpush2.bf16.msra.mxu0 0
    %3003 = vmatprep.subr.bf16.mxu0 0
    %3004 = vmatpush2.bf16.msra.mxu0 0
    %3005 = vmatprep.subr.bf16.mxu0 0
    %3006 = vmatpush2.bf16.msra.mxu0 0
    %3007 = vmatprep.subr.bf16.mxu0 0
    %3008 = vmatpush2.bf16.msra.mxu0 0
    %3009 = vmatprep.subr.bf16.mxu0 0
    %3010 = vmatpush2.bf16.msra.mxu0 0
    %3011 = vmatprep.subr.bf16.mxu0 0
    %3012 = vmatpush2.bf16.msra.mxu0 0
    %3013 = vmatprep.mubr.bf16.mxu0 0
    %3014 = vmatmul.mubr.bf16.gmra.mxu0 %v2970
    %v3015 = vpop.f32.mrf.mxu0
    %v3016 = vadd.f32 %v2954, %v3015
    %v3017 = vpop.f32.mrf.mxu0
    %v3018 = vpop.f32.mrf.mxu0
    %v3019 = vpop.f32.mrf.mxu0
    %3020 = vmatprep.mubr.bf16.mxu0 0
    %3021 = vmatmul.mubr.bf16.gmra.mxu0 %v2973
    %v3022 = vpop.f32.mrf.mxu0
    %v3023 = vpop.f32.mrf.mxu0
    %v3024 = vpop.f32.mrf.mxu0
    %v3025 = vpop.f32.mrf.mxu0
    %3026 = vmatprep.mubr.bf16.mxu0 0
    %3027 = vmatmul.mubr.bf16.gmra.mxu0 %v2976
    %v3028 = vpop.f32.mrf.mxu0
    %v3029 = vpop.f32.mrf.mxu0
    %v3030 = vpop.f32.mrf.mxu0
    %v3031 = vpop.f32.mrf.mxu0
    %3032 = vmatprep.mubr.bf16.mxu0 0
    %3033 = vmatmul.mubr.bf16.gmra.mxu0 %v2979
    %v3034 = vpop.f32.mrf.mxu0
    %v3035 = vadd.f32 %v2954, %v3034
    %v3036 = vpop.f32.mrf.mxu0
    %v3037 = vpop.f32.mrf.mxu0
    %v3038 = vpop.f32.mrf.mxu0
    %3039 = vdwg.mxu0
    %v3040 = vmax.f32 %v3016, 0.0
    %v3041 = vmax.f32 %v3035, 0.0
    %vm3042 = vcmask 1040384
    %v3043 = vsel %vm3042, %v3040, %v3041
    %vm3044 = vcmask 254976
    %3045 = vst.msk [vmem:[#allocation2] sm:$0x3] %vm3044, %v3043
    // Predicated region
    $region54: #{primal_base7_forward.1} parent=1 // pred_check
      _
    $region55: #{primal_base7_forward.1} parent=1 // pred_check_branch
      %3047 = sbr.rel (0) target = $region57
    $region56: #{primal_base7_forward.1} parent=1 // pred_region
      %s3049 = ssub.s32 32, 32
      %3050 = vsyncadd [#allocation3], %s3049
      %s3052 = sshll.u32 [#allocation2], 4
      %s3053 = int_to_ptr.vmem [resolvable:$true] %s3052
      %3055 = dma.vmem_to_hbm [thread:$0]  %s3053, 32, %s13, [#allocation3]
    $region57: #{primal_base7_forward.1} parent=1 // pred_fallthru
      _
    // Predicated region
    $region58: #{primal_base7_forward.1} parent=1 // pred_check
      _
    $region59: #{primal_base7_forward.1} parent=1 // pred_check_branch
      %3057 = sbr.rel (0) target = $region61
    $region60: #{primal_base7_forward.1} parent=1 // pred_region
      %3058 = dma.done [#allocation3], 32
    $region61: #{primal_base7_forward.1} parent=1 // pred_fallthru
      _
    %3059 = vsyncpa [#allocation3], 1

</llo_original>
